<compile_context>
chip_gen: v7x
topology: tpu7x:2x2x1
jax: 0.10.0
libtpu: 0.0.40
codegen_flags: <defaults>
</compile_context>

<pallas_src>
import jax
import jax.numpy as jnp
import numpy as np
from jax.experimental import pallas as pl
from jax.experimental.pallas import tpu as pltpu

# --- synthetic config (mirrors `conf` in the PyTorch module) ---
NUM_USERS, NUM_ITEMS = 10, 12
MF_DIM = 16
HIDDEN = 32
WORD_DIM = 32
VOCAB = 64
VOCAB_PAD = 128      # lane-dense padding of the vocab axis (zeros, masked in CE)
T = 8                # rev_len / sequence length
B = 8                # batch
PAD = 0


def att2seq_kernel(x_ref, tgt_ref, ue_ref, ie_ref, wh_ref, wgx_ref, wgh_ref,
                   w10_ref, w13_ref, logits_ref, loss_ref, gi_scr, ha_scr):
    H = HIDDEN
    ue = ue_ref[...]                                     # [B, MF_DIM]
    ie = ie_ref[...]                                     # [B, MF_DIM]

    # --- encoder (once): h0 = tanh((ue + ie) @ W_hidden), bias = 0 ---
    h0 = jnp.tanh(jnp.dot(ue + ie, wh_ref[...],
                          preferred_element_type=jnp.float32))      # [B, HIDDEN]

    # --- hoisted input-side GRU matmul: no serial dependence on h ---
    # columns = [gi_r | gi_z | gi_n | 0]
    gi_scr[...] = jnp.dot(x_ref[...], wgx_ref[...],
                          preferred_element_type=jnp.float32)        # [T*B, 4H]

    # --- hoisted attention projections (time-invariant) ---
    w10 = w10_ref[...]                                   # [1, MF_DIM + HIDDEN]
    w10_v = w10[:, :MF_DIM]                              # [1, MF_DIM]
    w10_q = w10[:, MF_DIM:]                              # [1, HIDDEN]
    u_dot = jnp.sum(ue * w10_v, axis=-1, keepdims=True)  # [B, 1]
    i_dot = jnp.sum(ie * w10_v, axis=-1, keepdims=True)  # [B, 1]
    ui_dot = jnp.concatenate([u_dot, i_dot], axis=-1)    # [B, 2] (hoisted concat)

    # hidden-side GRU weight, columns = [gh_r | gh_z | 0 | gh_n]
    wgh = wgh_ref[...]                                   # [HIDDEN, 4H]

    def step(t, h):
        row = pl.multiple_of(t * B, B)                   # sublane-aligned offset
        # g columns: [r_pre | z_pre | gi_n | gh_n]   (K = 32 per-step matmul)
        g = gi_scr[pl.ds(row, B), :] + jnp.dot(
            h, wgh, preferred_element_type=jnp.float32)              # [B, 4H]
        sig = jax.nn.sigmoid(g)                          # one EUP pass, whole vreg
        r = sig[:, :H]
        z = sig[:, H:2 * H]
        n = jnp.tanh(g[:, 2 * H:3 * H] + r * g[:, 3 * H:])
        h_new = (1.0 - z) * n + z * h                    # [B, HIDDEN]

        # 2-way attention over {user_embed, item_embed} (mask = ones)
        q_part = jnp.sum(h_new * w10_q, axis=-1, keepdims=True)      # [B, 1]
        a2 = jnp.exp(jnp.tanh(ui_dot + q_part))          # [B, 2]: 1 tanh + 1 exp
        a4 = jnp.sum(a2, axis=-1, keepdims=True) + 1e-6  # [B, 1]
        inv = pl.reciprocal(a4, approx=True)             # 1 vrcp instead of 2 divs
        a_t = (a2[:, :1] * inv) * ue + (a2[:, 1:2] * inv) * ie       # [B, MF_DIM]

        # merged scratch store: lanes [0:H] = h_t, lanes [H:H+MF] = a_t
        ha_scr[pl.ds(row, B), :] = jnp.concatenate([h_new, a_t], axis=-1)
        return h_new

    jax.lax.fori_loop(0, T, step, h0, unroll=True)

    # --- deferred vocab projection: ONE batched, lane-dense matmul ---
    logits = jnp.dot(ha_scr[...], w13_ref[...],
                     preferred_element_type=jnp.float32)             # [T*B, 128]
    logits_ref[...] = logits                             # single unmasked store

    # --- cross entropy, reduction='none', ignore_index=PAD ---
    tgt = tgt_ref[...]                                   # [T*B, 1] int32
    # additive pad mask (single-vreg), padded vocab columns -> -1e30
    pad_row = jnp.where(
        jax.lax.broadcasted_iota(jnp.int32, (1, VOCAB_PAD), 1) < VOCAB,
        0.0, -1e30)                                      # [1, 128]
    masked = logits + pad_row
    m = jnp.max(masked, axis=-1, keepdims=True)
    lse = m + jnp.log(jnp.sum(jnp.exp(masked - m), axis=-1, keepdims=True))
    col = jax.lax.broadcasted_iota(jnp.int32, (T * B, VOCAB_PAD), 1)
    picked = jnp.sum(jnp.where(col == tgt, logits, 0.0), axis=-1, keepdims=True)
    loss_ref[...] = jnp.where(tgt == PAD, 0.0, lse - picked)          # [T*B, 1]


def att2seq_forward(word_emb_seq, review_target, user_embed, item_embed,
                    w_hidden, w_ih, w_hh, w_eq10, w_eq13):
    H = HIDDEN
    # input-side GRU weight [WORD_DIM, 4H]; columns = [r | z | gi_n | 0]
    w_gx = jnp.concatenate(
        [w_ih[:, :H], w_ih[:, H:2 * H], w_ih[:, 2 * H:],
         jnp.zeros((WORD_DIM, H), jnp.float32)], axis=1)
    # hidden-side GRU weight [HIDDEN, 4H]; columns = [r | z | 0 | gh_n]
    w_gh = jnp.concatenate(
        [w_hh[:, :H], w_hh[:, H:2 * H],
         jnp.zeros((HIDDEN, H), jnp.float32), w_hh[:, 2 * H:]], axis=1)
    w10_row = w_eq10.T                                            # [1, MF_DIM+HIDDEN]
    w13_pad = jnp.pad(w_eq13, ((0, 0), (0, VOCAB_PAD - VOCAB)))   # [48, 128]
    x_flat = word_emb_seq.reshape(T * B, WORD_DIM)                # t-major rows
    tgt2d = review_target.astype(jnp.int32).reshape(T * B, 1)

    const2 = lambda i: (0, 0)
    logits_pad, loss = pl.pallas_call(
        att2seq_kernel,
        out_shape=(jax.ShapeDtypeStruct((T * B, VOCAB_PAD), jnp.float32),
                   jax.ShapeDtypeStruct((T * B, 1), jnp.float32)),
        grid_spec=pltpu.PrefetchScalarGridSpec(
            num_scalar_prefetch=0,
            grid=(1,),
            in_specs=[
                pl.BlockSpec((T * B, WORD_DIM), const2),               # word emb (flat)
                pl.BlockSpec((T * B, 1), const2),                      # targets
                pl.BlockSpec((B, MF_DIM), const2),                     # user embed
                pl.BlockSpec((B, MF_DIM), const2),                     # item embed
                pl.BlockSpec((MF_DIM, HIDDEN), const2),                # encoder W
                pl.BlockSpec((WORD_DIM, 4 * HIDDEN), const2),          # GRU W (input side)
                pl.BlockSpec((HIDDEN, 4 * HIDDEN), const2),            # GRU W (hidden side)
                pl.BlockSpec((1, MF_DIM + HIDDEN), const2),            # eq10 W (row)
                pl.BlockSpec((HIDDEN + MF_DIM, VOCAB_PAD), const2),    # eq13 W padded
            ],
            out_specs=(
                pl.BlockSpec((T * B, VOCAB_PAD), const2),
                pl.BlockSpec((T * B, 1), const2),
            ),
            scratch_shapes=[pltpu.VMEM((T * B, 4 * HIDDEN), jnp.float32),      # gi_all
                            pltpu.VMEM((T * B, HIDDEN + MF_DIM), jnp.float32)],# [h|a]
        ),
        compiler_params=pltpu.CompilerParams(
            dimension_semantics=("arbitrary",)),
    )(x_flat, tgt2d, user_embed, item_embed, w_hidden, w_gx, w_gh,
      w10_row, w13_pad)

    word_probit = logits_pad[:, :VOCAB]            # == torch.cat over timesteps
    out_loss = loss.reshape(T * B)
    valid = (review_target.reshape(-1) != PAD).astype(jnp.float32)
    obj = jnp.sum(out_loss) / jnp.maximum(jnp.sum(valid), 1.0)
    return out_loss, obj, word_probit


# --- pure-JAX reference (for correctness check only) ---
def reference_forward(word_emb_seq, review_target, ue, ie,
                      w_hidden, w_ih, w_hh, w_eq10, w_eq13):
    h = jnp.tanh((ue + ie) @ w_hidden)
    logits_all = []
    for t in range(T):
        x = word_emb_seq[t]
        gi, gh = x @ w_ih, h @ w_hh
        r = jax.nn.sigmoid(gi[:, :HIDDEN] + gh[:, :HIDDEN])
        z = jax.nn.sigmoid(gi[:, HIDDEN:2 * HIDDEN] + gh[:, HIDDEN:2 * HIDDEN])
        n = jnp.tanh(gi[:, 2 * HIDDEN:] + r * gh[:, 2 * HIDDEN:])
        h = (1.0 - z) * n + z * h
        value = jnp.stack([ue, ie], 0)                                  # [2,B,MF]
        key = jnp.concatenate([value, jnp.broadcast_to(h, (2, B, HIDDEN))], 2)
        a2 = jnp.exp(jnp.tanh(key @ w_eq10))                            # [2,B,1]
        a5 = a2 / (jnp.sum(a2, 0, keepdims=True) + 1e-6)
        a_t = jnp.sum(a5 * value, 0)
        logits_all.append(jnp.concatenate([h, a_t], 1) @ w_eq13)
    logits = jnp.concatenate(logits_all, 0)
    tgt = review_target.reshape(-1)
    lse = jax.scipy.special.logsumexp(logits, axis=-1)
    picked = jnp.take_along_axis(logits, tgt[:, None], axis=1)[:, 0]
    loss = jnp.where(tgt == PAD, 0.0, lse - picked)
    obj = jnp.sum(loss) / jnp.maximum(jnp.sum((tgt != PAD).astype(jnp.float32)), 1.0)
    return loss, obj


def xavier_uniform(key, shape, fan_in, fan_out):
    bound = float(np.sqrt(6.0 / (fan_in + fan_out)))
    return jax.random.uniform(key, shape, jnp.float32, -bound, bound)


if __name__ == "__main__":
    root = jax.random.PRNGKey(0)
    keys = jax.random.split(root, 12)

    # parameters (deterministic synthetic init; biases are zero per reinit())
    user_emb_table = jax.random.normal(keys[0], (NUM_USERS, MF_DIM), jnp.float32)
    item_emb_table = jax.random.normal(keys[1], (NUM_ITEMS, MF_DIM), jnp.float32)
    word_emb_table = jax.random.normal(keys[2], (VOCAB, WORD_DIM), jnp.float32)
    w_hidden = xavier_uniform(keys[3], (MF_DIM, HIDDEN), MF_DIM, HIDDEN)
    w_ih = xavier_uniform(keys[4], (WORD_DIM, 3 * HIDDEN), WORD_DIM, 3 * HIDDEN)
    w_hh = xavier_uniform(keys[5], (HIDDEN, 3 * HIDDEN), HIDDEN, 3 * HIDDEN)
    w_eq10 = xavier_uniform(keys[6], (MF_DIM + HIDDEN, 1), MF_DIM + HIDDEN, 1)
    w_eq13 = xavier_uniform(keys[7], (HIDDEN + MF_DIM, VOCAB),
                            HIDDEN + MF_DIM, VOCAB)

    # inputs
    user = jax.random.randint(keys[8], (B,), 0, NUM_USERS)
    item = jax.random.randint(keys[9], (B,), 0, NUM_ITEMS)
    review_input = jax.random.randint(keys[10], (T, B), 0, VOCAB)
    review_target = jax.random.randint(keys[11], (T, B), 0, VOCAB)  # some PADs (0)
    # the in-kernel `col == tgt` pick requires all targets < VOCAB
    assert int(jnp.max(review_target)) < VOCAB

    # plain-JAX glue: embedding gathers
    ue = user_emb_table[user]                    # [B, MF_DIM]
    ie = item_emb_table[item]                    # [B, MF_DIM]
    word_emb_seq = word_emb_table[review_input]  # [T, B, WORD_DIM]

    out_loss, obj, word_probit = att2seq_forward(
        word_emb_seq, review_target, ue, ie,
        w_hidden, w_ih, w_hh, w_eq10, w_eq13)
    jax.block_until_ready((out_loss, obj, word_probit))

    ref_loss, ref_obj = reference_forward(
        word_emb_seq, review_target, ue, ie,
        w_hidden, w_ih, w_hh, w_eq10, w_eq13)

    # tolerance widened slightly vs 2e-4: pl.reciprocal(approx=True) in the
    # attention normalizer introduces small (<~1e-3) drift vs the exact divide.
    np.testing.assert_allclose(np.asarray(out_loss), np.asarray(ref_loss),
                               rtol=2e-3, atol=2e-3)
    np.testing.assert_allclose(np.asarray(obj), np.asarray(ref_obj),
                               rtol=2e-3, atol=2e-3)
    print("KERNEL_OK")
</pallas_src>

<mosaic_0001>
module attributes {stable_mosaic.version = 11 : i64} {
  func.func @att2seq_kernel(%arg0: i32, %arg1: memref<64x32xf32, #tpu.memory_space<vmem>>, %arg2: memref<64x1xi32, #tpu.memory_space<vmem>>, %arg3: memref<8x16xf32, #tpu.memory_space<vmem>>, %arg4: memref<8x16xf32, #tpu.memory_space<vmem>>, %arg5: memref<16x32xf32, #tpu.memory_space<vmem>>, %arg6: memref<32x128xf32, #tpu.memory_space<vmem>>, %arg7: memref<32x128xf32, #tpu.memory_space<vmem>>, %arg8: memref<1x48xf32, #tpu.memory_space<vmem>>, %arg9: memref<48x128xf32, #tpu.memory_space<vmem>>, %arg10: memref<64x128xf32, #tpu.memory_space<vmem>>, %arg11: memref<64x1xf32, #tpu.memory_space<vmem>>, %arg12: memref<64x128xf32, #tpu.memory_space<vmem>>, %arg13: memref<64x48xf32, #tpu.memory_space<vmem>>) attributes {dimension_semantics = [#tpu.dimension_semantics<arbitrary>], iteration_bounds = array<i64: 1>, scalar_prefetch = 0 : i64, scratch_operands = 2 : i64, tpu.core_type = #tpu.core_type<tc>, window_params = [{pipeline_mode = #tpu.pipeline_mode<synchronous>, transform_indices = @transform_0, window_bounds = array<i64: 64, 32>}, {pipeline_mode = #tpu.pipeline_mode<synchronous>, transform_indices = @transform_1, window_bounds = array<i64: 64, 1>}, {pipeline_mode = #tpu.pipeline_mode<synchronous>, transform_indices = @transform_2, window_bounds = array<i64: 8, 16>}, {pipeline_mode = #tpu.pipeline_mode<synchronous>, transform_indices = @transform_3, window_bounds = array<i64: 8, 16>}, {pipeline_mode = #tpu.pipeline_mode<synchronous>, transform_indices = @transform_4, window_bounds = array<i64: 16, 32>}, {pipeline_mode = #tpu.pipeline_mode<synchronous>, transform_indices = @transform_5, window_bounds = array<i64: 32, 128>}, {pipeline_mode = #tpu.pipeline_mode<synchronous>, transform_indices = @transform_6, window_bounds = array<i64: 32, 128>}, {pipeline_mode = #tpu.pipeline_mode<synchronous>, transform_indices = @transform_7, window_bounds = array<i64: 1, 48>}, {pipeline_mode = #tpu.pipeline_mode<synchronous>, transform_indices = @transform_8, window_bounds = array<i64: 48, 128>}, {pipeline_mode = #tpu.pipeline_mode<synchronous>, transform_indices = @transform_9, window_bounds = array<i64: 64, 128>}, {pipeline_mode = #tpu.pipeline_mode<synchronous>, transform_indices = @transform_10, window_bounds = array<i64: 64, 1>}]} {
    %c0 = arith.constant 0 : index
    %c0_0 = arith.constant 0 : index
    %0 = vector.load %arg3[%c0, %c0_0] : memref<8x16xf32, #tpu.memory_space<vmem>>, vector<8x16xf32>
    %c0_1 = arith.constant 0 : index
    %c0_2 = arith.constant 0 : index
    %1 = vector.load %arg4[%c0_1, %c0_2] : memref<8x16xf32, #tpu.memory_space<vmem>>, vector<8x16xf32>
    %2 = arith.addf %0, %1 : vector<8x16xf32>
    %c0_3 = arith.constant 0 : index
    %c0_4 = arith.constant 0 : index
    %3 = vector.load %arg5[%c0_3, %c0_4] : memref<16x32xf32, #tpu.memory_space<vmem>>, vector<16x32xf32>
    %cst = arith.constant dense<0.000000e+00> : vector<8x32xf32>
    %4 = tpu.matmul %2, %3, %cst {dimension_numbers = #tpu.dot_dimension_numbers<[1], [0], [0], [1], [0, 0, 1, 1], [], []>} : vector<8x16xf32>, vector<16x32xf32>, vector<8x32xf32> -> vector<8x32xf32>
    %5 = math.tanh %4 : vector<8x32xf32>
    %c0_5 = arith.constant 0 : index
    %c0_6 = arith.constant 0 : index
    %6 = vector.load %arg1[%c0_5, %c0_6] : memref<64x32xf32, #tpu.memory_space<vmem>>, vector<64x32xf32>
    %c0_7 = arith.constant 0 : index
    %c0_8 = arith.constant 0 : index
    %7 = vector.load %arg6[%c0_7, %c0_8] : memref<32x128xf32, #tpu.memory_space<vmem>>, vector<32x128xf32>
    %cst_9 = arith.constant dense<0.000000e+00> : vector<64x128xf32>
    %8 = tpu.matmul %6, %7, %cst_9 {dimension_numbers = #tpu.dot_dimension_numbers<[1], [0], [0], [1], [0, 0, 1, 1], [], []>} : vector<64x32xf32>, vector<32x128xf32>, vector<64x128xf32> -> vector<64x128xf32>
    %c0_10 = arith.constant 0 : index
    %c0_11 = arith.constant 0 : index
    %9 = vector.load %arg12[%c0_10, %c0_11] : memref<64x128xf32, #tpu.memory_space<vmem>>, vector<64x128xf32>
    tpu.vector_store %arg12[%c0_10, %c0_11], %8 {strides = array<i32>} : memref<64x128xf32, #tpu.memory_space<vmem>>, vector<64x128xf32>,
    %c0_12 = arith.constant 0 : index
    %c0_13 = arith.constant 0 : index
    %10 = vector.load %arg8[%c0_12, %c0_13] : memref<1x48xf32, #tpu.memory_space<vmem>>, vector<1x48xf32>
    %11 = vector.extract_strided_slice %10 {offsets = [0, 0], sizes = [1, 16], strides = [1, 1]} : vector<1x48xf32> to vector<1x16xf32>
    %12 = vector.extract_strided_slice %10 {offsets = [0, 16], sizes = [1, 32], strides = [1, 1]} : vector<1x48xf32> to vector<1x32xf32>
    %13 = vector.broadcast %11 : vector<1x16xf32> to vector<8x16xf32>
    %14 = arith.mulf %0, %13 : vector<8x16xf32>
    %cst_14 = arith.constant dense<0.000000e+00> : vector<8xf32>
    %15 = vector.multi_reduction <add>, %14, %cst_14 [1] : vector<8x16xf32> to vector<8xf32>
    %16 = vector.shape_cast %15 : vector<8xf32> to vector<8x1xf32>
    %17 = vector.broadcast %11 : vector<1x16xf32> to vector<8x16xf32>
    %18 = arith.mulf %1, %17 : vector<8x16xf32>
    %cst_15 = arith.constant dense<0.000000e+00> : vector<8xf32>
    %19 = vector.multi_reduction <add>, %18, %cst_15 [1] : vector<8x16xf32> to vector<8xf32>
    %20 = vector.shape_cast %19 : vector<8xf32> to vector<8x1xf32>
    %21 = tpu.concatenate %16, %20 in 1 : vector<8x1xf32>, vector<8x1xf32> -> vector<8x2xf32>
    %c0_16 = arith.constant 0 : index
    %c0_17 = arith.constant 0 : index
    %22 = vector.load %arg7[%c0_16, %c0_17] : memref<32x128xf32, #tpu.memory_space<vmem>>, vector<32x128xf32>
    %c0_i32 = arith.constant 0 : i32
    %c8_i32 = arith.constant 8 : i32
    %23 = arith.muli %c0_i32, %c8_i32 : i32
    %24 = tpu.assume_multiple %23, 8 : i32
    %25 = arith.index_cast %24 : i32 to index
    %c0_18 = arith.constant 0 : index
    %26 = vector.load %arg12[%25, %c0_18] : memref<64x128xf32, #tpu.memory_space<vmem>>, vector<8x128xf32>
    %cst_19 = arith.constant dense<0.000000e+00> : vector<8x128xf32>
    %27 = tpu.matmul %5, %22, %cst_19 {dimension_numbers = #tpu.dot_dimension_numbers<[1], [0], [0], [1], [0, 0, 1, 1], [], []>} : vector<8x32xf32>, vector<32x128xf32>, vector<8x128xf32> -> vector<8x128xf32>
    %28 = arith.addf %26, %27 : vector<8x128xf32>
    %29 = arith.negf %28 : vector<8x128xf32>
    %30 = math.exp %29 : vector<8x128xf32>
    %cst_20 = arith.constant 1.000000e+00 : f32
    %31 = vector.broadcast %cst_20 : f32 to vector<8x128xf32>
    %32 = arith.addf %31, %30 : vector<8x128xf32>
    %33 = arith.divf %31, %32 : vector<8x128xf32>
    %34 = vector.extract_strided_slice %33 {offsets = [0, 0], sizes = [8, 32], strides = [1, 1]} : vector<8x128xf32> to vector<8x32xf32>
    %35 = vector.extract_strided_slice %33 {offsets = [0, 32], sizes = [8, 32], strides = [1, 1]} : vector<8x128xf32> to vector<8x32xf32>
    %36 = vector.extract_strided_slice %28 {offsets = [0, 64], sizes = [8, 32], strides = [1, 1]} : vector<8x128xf32> to vector<8x32xf32>
    %37 = vector.extract_strided_slice %28 {offsets = [0, 96], sizes = [8, 32], strides = [1, 1]} : vector<8x128xf32> to vector<8x32xf32>
    %38 = arith.mulf %34, %37 : vector<8x32xf32>
    %39 = arith.addf %36, %38 : vector<8x32xf32>
    %40 = math.tanh %39 : vector<8x32xf32>
    %cst_21 = arith.constant 1.000000e+00 : f32
    %41 = vector.broadcast %cst_21 : f32 to vector<8x32xf32>
    %42 = arith.subf %41, %35 : vector<8x32xf32>
    %43 = arith.mulf %42, %40 : vector<8x32xf32>
    %44 = arith.mulf %35, %5 : vector<8x32xf32>
    %45 = arith.addf %43, %44 : vector<8x32xf32>
    %46 = vector.broadcast %12 : vector<1x32xf32> to vector<8x32xf32>
    %47 = arith.mulf %45, %46 : vector<8x32xf32>
    %cst_22 = arith.constant dense<0.000000e+00> : vector<8xf32>
    %48 = vector.multi_reduction <add>, %47, %cst_22 [1] : vector<8x32xf32> to vector<8xf32>
    %49 = vector.shape_cast %48 : vector<8xf32> to vector<8x1xf32>
    %50 = vector.broadcast %49 : vector<8x1xf32> to vector<8x2xf32>
    %51 = arith.addf %21, %50 : vector<8x2xf32>
    %52 = math.tanh %51 : vector<8x2xf32>
    %53 = math.exp %52 : vector<8x2xf32>
    %cst_23 = arith.constant dense<0.000000e+00> : vector<8xf32>
    %54 = vector.multi_reduction <add>, %53, %cst_23 [1] : vector<8x2xf32> to vector<8xf32>
    %55 = vector.shape_cast %54 : vector<8xf32> to vector<8x1xf32>
    %cst_24 = arith.constant 9.99999997E-7 : f32
    %56 = vector.broadcast %cst_24 : f32 to vector<8x1xf32>
    %57 = arith.addf %55, %56 : vector<8x1xf32>
    %58 = tpu.reciprocal %57 {approx = true} : vector<8x1xf32> -> vector<8x1xf32>
    %59 = vector.extract_strided_slice %53 {offsets = [0, 0], sizes = [8, 1], strides = [1, 1]} : vector<8x2xf32> to vector<8x1xf32>
    %60 = arith.mulf %59, %58 : vector<8x1xf32>
    %61 = vector.broadcast %60 : vector<8x1xf32> to vector<8x16xf32>
    %62 = arith.mulf %61, %0 : vector<8x16xf32>
    %63 = vector.extract_strided_slice %53 {offsets = [0, 1], sizes = [8, 1], strides = [1, 1]} : vector<8x2xf32> to vector<8x1xf32>
    %64 = arith.mulf %63, %58 : vector<8x1xf32>
    %65 = vector.broadcast %64 : vector<8x1xf32> to vector<8x16xf32>
    %66 = arith.mulf %65, %1 : vector<8x16xf32>
    %67 = arith.addf %62, %66 : vector<8x16xf32>
    %68 = tpu.concatenate %45, %67 in 1 : vector<8x32xf32>, vector<8x16xf32> -> vector<8x48xf32>
    %69 = arith.index_cast %24 : i32 to index
    %c0_25 = arith.constant 0 : index
    %70 = vector.load %arg13[%69, %c0_25] : memref<64x48xf32, #tpu.memory_space<vmem>>, vector<8x48xf32>
    tpu.vector_store %arg13[%69, %c0_25], %68 {strides = array<i32>} : memref<64x48xf32, #tpu.memory_space<vmem>>, vector<8x48xf32>,
    %c1_i32 = arith.constant 1 : i32
    %c8_i32_26 = arith.constant 8 : i32
    %71 = arith.muli %c1_i32, %c8_i32_26 : i32
    %72 = tpu.assume_multiple %71, 8 : i32
    %73 = arith.index_cast %72 : i32 to index
    %c0_27 = arith.constant 0 : index
    %74 = vector.load %arg12[%73, %c0_27] : memref<64x128xf32, #tpu.memory_space<vmem>>, vector<8x128xf32>
    %cst_28 = arith.constant dense<0.000000e+00> : vector<8x128xf32>
    %75 = tpu.matmul %45, %22, %cst_28 {dimension_numbers = #tpu.dot_dimension_numbers<[1], [0], [0], [1], [0, 0, 1, 1], [], []>} : vector<8x32xf32>, vector<32x128xf32>, vector<8x128xf32> -> vector<8x128xf32>
    %76 = arith.addf %74, %75 : vector<8x128xf32>
    %77 = arith.negf %76 : vector<8x128xf32>
    %78 = math.exp %77 : vector<8x128xf32>
    %cst_29 = arith.constant 1.000000e+00 : f32
    %79 = vector.broadcast %cst_29 : f32 to vector<8x128xf32>
    %80 = arith.addf %79, %78 : vector<8x128xf32>
    %81 = arith.divf %79, %80 : vector<8x128xf32>
    %82 = vector.extract_strided_slice %81 {offsets = [0, 0], sizes = [8, 32], strides = [1, 1]} : vector<8x128xf32> to vector<8x32xf32>
    %83 = vector.extract_strided_slice %81 {offsets = [0, 32], sizes = [8, 32], strides = [1, 1]} : vector<8x128xf32> to vector<8x32xf32>
    %84 = vector.extract_strided_slice %76 {offsets = [0, 64], sizes = [8, 32], strides = [1, 1]} : vector<8x128xf32> to vector<8x32xf32>
    %85 = vector.extract_strided_slice %76 {offsets = [0, 96], sizes = [8, 32], strides = [1, 1]} : vector<8x128xf32> to vector<8x32xf32>
    %86 = arith.mulf %82, %85 : vector<8x32xf32>
    %87 = arith.addf %84, %86 : vector<8x32xf32>
    %88 = math.tanh %87 : vector<8x32xf32>
    %cst_30 = arith.constant 1.000000e+00 : f32
    %89 = vector.broadcast %cst_30 : f32 to vector<8x32xf32>
    %90 = arith.subf %89, %83 : vector<8x32xf32>
    %91 = arith.mulf %90, %88 : vector<8x32xf32>
    %92 = arith.mulf %83, %45 : vector<8x32xf32>
    %93 = arith.addf %91, %92 : vector<8x32xf32>
    %94 = vector.broadcast %12 : vector<1x32xf32> to vector<8x32xf32>
    %95 = arith.mulf %93, %94 : vector<8x32xf32>
    %cst_31 = arith.constant dense<0.000000e+00> : vector<8xf32>
    %96 = vector.multi_reduction <add>, %95, %cst_31 [1] : vector<8x32xf32> to vector<8xf32>
    %97 = vector.shape_cast %96 : vector<8xf32> to vector<8x1xf32>
    %98 = vector.broadcast %97 : vector<8x1xf32> to vector<8x2xf32>
    %99 = arith.addf %21, %98 : vector<8x2xf32>
    %100 = math.tanh %99 : vector<8x2xf32>
    %101 = math.exp %100 : vector<8x2xf32>
    %cst_32 = arith.constant dense<0.000000e+00> : vector<8xf32>
    %102 = vector.multi_reduction <add>, %101, %cst_32 [1] : vector<8x2xf32> to vector<8xf32>
    %103 = vector.shape_cast %102 : vector<8xf32> to vector<8x1xf32>
    %cst_33 = arith.constant 9.99999997E-7 : f32
    %104 = vector.broadcast %cst_33 : f32 to vector<8x1xf32>
    %105 = arith.addf %103, %104 : vector<8x1xf32>
    %106 = tpu.reciprocal %105 {approx = true} : vector<8x1xf32> -> vector<8x1xf32>
    %107 = vector.extract_strided_slice %101 {offsets = [0, 0], sizes = [8, 1], strides = [1, 1]} : vector<8x2xf32> to vector<8x1xf32>
    %108 = arith.mulf %107, %106 : vector<8x1xf32>
    %109 = vector.broadcast %108 : vector<8x1xf32> to vector<8x16xf32>
    %110 = arith.mulf %109, %0 : vector<8x16xf32>
    %111 = vector.extract_strided_slice %101 {offsets = [0, 1], sizes = [8, 1], strides = [1, 1]} : vector<8x2xf32> to vector<8x1xf32>
    %112 = arith.mulf %111, %106 : vector<8x1xf32>
    %113 = vector.broadcast %112 : vector<8x1xf32> to vector<8x16xf32>
    %114 = arith.mulf %113, %1 : vector<8x16xf32>
    %115 = arith.addf %110, %114 : vector<8x16xf32>
    %116 = tpu.concatenate %93, %115 in 1 : vector<8x32xf32>, vector<8x16xf32> -> vector<8x48xf32>
    %117 = arith.index_cast %72 : i32 to index
    %c0_34 = arith.constant 0 : index
    %118 = vector.load %arg13[%117, %c0_34] : memref<64x48xf32, #tpu.memory_space<vmem>>, vector<8x48xf32>
    tpu.vector_store %arg13[%117, %c0_34], %116 {strides = array<i32>} : memref<64x48xf32, #tpu.memory_space<vmem>>, vector<8x48xf32>,
    %c2_i32 = arith.constant 2 : i32
    %c8_i32_35 = arith.constant 8 : i32
    %119 = arith.muli %c2_i32, %c8_i32_35 : i32
    %120 = tpu.assume_multiple %119, 8 : i32
    %121 = arith.index_cast %120 : i32 to index
    %c0_36 = arith.constant 0 : index
    %122 = vector.load %arg12[%121, %c0_36] : memref<64x128xf32, #tpu.memory_space<vmem>>, vector<8x128xf32>
    %cst_37 = arith.constant dense<0.000000e+00> : vector<8x128xf32>
    %123 = tpu.matmul %93, %22, %cst_37 {dimension_numbers = #tpu.dot_dimension_numbers<[1], [0], [0], [1], [0, 0, 1, 1], [], []>} : vector<8x32xf32>, vector<32x128xf32>, vector<8x128xf32> -> vector<8x128xf32>
    %124 = arith.addf %122, %123 : vector<8x128xf32>
    %125 = arith.negf %124 : vector<8x128xf32>
    %126 = math.exp %125 : vector<8x128xf32>
    %cst_38 = arith.constant 1.000000e+00 : f32
    %127 = vector.broadcast %cst_38 : f32 to vector<8x128xf32>
    %128 = arith.addf %127, %126 : vector<8x128xf32>
    %129 = arith.divf %127, %128 : vector<8x128xf32>
    %130 = vector.extract_strided_slice %129 {offsets = [0, 0], sizes = [8, 32], strides = [1, 1]} : vector<8x128xf32> to vector<8x32xf32>
    %131 = vector.extract_strided_slice %129 {offsets = [0, 32], sizes = [8, 32], strides = [1, 1]} : vector<8x128xf32> to vector<8x32xf32>
    %132 = vector.extract_strided_slice %124 {offsets = [0, 64], sizes = [8, 32], strides = [1, 1]} : vector<8x128xf32> to vector<8x32xf32>
    %133 = vector.extract_strided_slice %124 {offsets = [0, 96], sizes = [8, 32], strides = [1, 1]} : vector<8x128xf32> to vector<8x32xf32>
    %134 = arith.mulf %130, %133 : vector<8x32xf32>
    %135 = arith.addf %132, %134 : vector<8x32xf32>
    %136 = math.tanh %135 : vector<8x32xf32>
    %cst_39 = arith.constant 1.000000e+00 : f32
    %137 = vector.broadcast %cst_39 : f32 to vector<8x32xf32>
    %138 = arith.subf %137, %131 : vector<8x32xf32>
    %139 = arith.mulf %138, %136 : vector<8x32xf32>
    %140 = arith.mulf %131, %93 : vector<8x32xf32>
    %141 = arith.addf %139, %140 : vector<8x32xf32>
    %142 = vector.broadcast %12 : vector<1x32xf32> to vector<8x32xf32>
    %143 = arith.mulf %141, %142 : vector<8x32xf32>
    %cst_40 = arith.constant dense<0.000000e+00> : vector<8xf32>
    %144 = vector.multi_reduction <add>, %143, %cst_40 [1] : vector<8x32xf32> to vector<8xf32>
    %145 = vector.shape_cast %144 : vector<8xf32> to vector<8x1xf32>
    %146 = vector.broadcast %145 : vector<8x1xf32> to vector<8x2xf32>
    %147 = arith.addf %21, %146 : vector<8x2xf32>
    %148 = math.tanh %147 : vector<8x2xf32>
    %149 = math.exp %148 : vector<8x2xf32>
    %cst_41 = arith.constant dense<0.000000e+00> : vector<8xf32>
    %150 = vector.multi_reduction <add>, %149, %cst_41 [1] : vector<8x2xf32> to vector<8xf32>
    %151 = vector.shape_cast %150 : vector<8xf32> to vector<8x1xf32>
    %cst_42 = arith.constant 9.99999997E-7 : f32
    %152 = vector.broadcast %cst_42 : f32 to vector<8x1xf32>
    %153 = arith.addf %151, %152 : vector<8x1xf32>
    %154 = tpu.reciprocal %153 {approx = true} : vector<8x1xf32> -> vector<8x1xf32>
    %155 = vector.extract_strided_slice %149 {offsets = [0, 0], sizes = [8, 1], strides = [1, 1]} : vector<8x2xf32> to vector<8x1xf32>
    %156 = arith.mulf %155, %154 : vector<8x1xf32>
    %157 = vector.broadcast %156 : vector<8x1xf32> to vector<8x16xf32>
    %158 = arith.mulf %157, %0 : vector<8x16xf32>
    %159 = vector.extract_strided_slice %149 {offsets = [0, 1], sizes = [8, 1], strides = [1, 1]} : vector<8x2xf32> to vector<8x1xf32>
    %160 = arith.mulf %159, %154 : vector<8x1xf32>
    %161 = vector.broadcast %160 : vector<8x1xf32> to vector<8x16xf32>
    %162 = arith.mulf %161, %1 : vector<8x16xf32>
    %163 = arith.addf %158, %162 : vector<8x16xf32>
    %164 = tpu.concatenate %141, %163 in 1 : vector<8x32xf32>, vector<8x16xf32> -> vector<8x48xf32>
    %165 = arith.index_cast %120 : i32 to index
    %c0_43 = arith.constant 0 : index
    %166 = vector.load %arg13[%165, %c0_43] : memref<64x48xf32, #tpu.memory_space<vmem>>, vector<8x48xf32>
    tpu.vector_store %arg13[%165, %c0_43], %164 {strides = array<i32>} : memref<64x48xf32, #tpu.memory_space<vmem>>, vector<8x48xf32>,
    %c3_i32 = arith.constant 3 : i32
    %c8_i32_44 = arith.constant 8 : i32
    %167 = arith.muli %c3_i32, %c8_i32_44 : i32
    %168 = tpu.assume_multiple %167, 8 : i32
    %169 = arith.index_cast %168 : i32 to index
    %c0_45 = arith.constant 0 : index
    %170 = vector.load %arg12[%169, %c0_45] : memref<64x128xf32, #tpu.memory_space<vmem>>, vector<8x128xf32>
    %cst_46 = arith.constant dense<0.000000e+00> : vector<8x128xf32>
    %171 = tpu.matmul %141, %22, %cst_46 {dimension_numbers = #tpu.dot_dimension_numbers<[1], [0], [0], [1], [0, 0, 1, 1], [], []>} : vector<8x32xf32>, vector<32x128xf32>, vector<8x128xf32> -> vector<8x128xf32>
    %172 = arith.addf %170, %171 : vector<8x128xf32>
    %173 = arith.negf %172 : vector<8x128xf32>
    %174 = math.exp %173 : vector<8x128xf32>
    %cst_47 = arith.constant 1.000000e+00 : f32
    %175 = vector.broadcast %cst_47 : f32 to vector<8x128xf32>
    %176 = arith.addf %175, %174 : vector<8x128xf32>
    %177 = arith.divf %175, %176 : vector<8x128xf32>
    %178 = vector.extract_strided_slice %177 {offsets = [0, 0], sizes = [8, 32], strides = [1, 1]} : vector<8x128xf32> to vector<8x32xf32>
    %179 = vector.extract_strided_slice %177 {offsets = [0, 32], sizes = [8, 32], strides = [1, 1]} : vector<8x128xf32> to vector<8x32xf32>
    %180 = vector.extract_strided_slice %172 {offsets = [0, 64], sizes = [8, 32], strides = [1, 1]} : vector<8x128xf32> to vector<8x32xf32>
    %181 = vector.extract_strided_slice %172 {offsets = [0, 96], sizes = [8, 32], strides = [1, 1]} : vector<8x128xf32> to vector<8x32xf32>
    %182 = arith.mulf %178, %181 : vector<8x32xf32>
    %183 = arith.addf %180, %182 : vector<8x32xf32>
    %184 = math.tanh %183 : vector<8x32xf32>
    %cst_48 = arith.constant 1.000000e+00 : f32
    %185 = vector.broadcast %cst_48 : f32 to vector<8x32xf32>
    %186 = arith.subf %185, %179 : vector<8x32xf32>
    %187 = arith.mulf %186, %184 : vector<8x32xf32>
    %188 = arith.mulf %179, %141 : vector<8x32xf32>
    %189 = arith.addf %187, %188 : vector<8x32xf32>
    %190 = vector.broadcast %12 : vector<1x32xf32> to vector<8x32xf32>
    %191 = arith.mulf %189, %190 : vector<8x32xf32>
    %cst_49 = arith.constant dense<0.000000e+00> : vector<8xf32>
    %192 = vector.multi_reduction <add>, %191, %cst_49 [1] : vector<8x32xf32> to vector<8xf32>
    %193 = vector.shape_cast %192 : vector<8xf32> to vector<8x1xf32>
    %194 = vector.broadcast %193 : vector<8x1xf32> to vector<8x2xf32>
    %195 = arith.addf %21, %194 : vector<8x2xf32>
    %196 = math.tanh %195 : vector<8x2xf32>
    %197 = math.exp %196 : vector<8x2xf32>
    %cst_50 = arith.constant dense<0.000000e+00> : vector<8xf32>
    %198 = vector.multi_reduction <add>, %197, %cst_50 [1] : vector<8x2xf32> to vector<8xf32>
    %199 = vector.shape_cast %198 : vector<8xf32> to vector<8x1xf32>
    %cst_51 = arith.constant 9.99999997E-7 : f32
    %200 = vector.broadcast %cst_51 : f32 to vector<8x1xf32>
    %201 = arith.addf %199, %200 : vector<8x1xf32>
    %202 = tpu.reciprocal %201 {approx = true} : vector<8x1xf32> -> vector<8x1xf32>
    %203 = vector.extract_strided_slice %197 {offsets = [0, 0], sizes = [8, 1], strides = [1, 1]} : vector<8x2xf32> to vector<8x1xf32>
    %204 = arith.mulf %203, %202 : vector<8x1xf32>
    %205 = vector.broadcast %204 : vector<8x1xf32> to vector<8x16xf32>
    %206 = arith.mulf %205, %0 : vector<8x16xf32>
    %207 = vector.extract_strided_slice %197 {offsets = [0, 1], sizes = [8, 1], strides = [1, 1]} : vector<8x2xf32> to vector<8x1xf32>
    %208 = arith.mulf %207, %202 : vector<8x1xf32>
    %209 = vector.broadcast %208 : vector<8x1xf32> to vector<8x16xf32>
    %210 = arith.mulf %209, %1 : vector<8x16xf32>
    %211 = arith.addf %206, %210 : vector<8x16xf32>
    %212 = tpu.concatenate %189, %211 in 1 : vector<8x32xf32>, vector<8x16xf32> -> vector<8x48xf32>
    %213 = arith.index_cast %168 : i32 to index
    %c0_52 = arith.constant 0 : index
    %214 = vector.load %arg13[%213, %c0_52] : memref<64x48xf32, #tpu.memory_space<vmem>>, vector<8x48xf32>
    tpu.vector_store %arg13[%213, %c0_52], %212 {strides = array<i32>} : memref<64x48xf32, #tpu.memory_space<vmem>>, vector<8x48xf32>,
    %c4_i32 = arith.constant 4 : i32
    %c8_i32_53 = arith.constant 8 : i32
    %215 = arith.muli %c4_i32, %c8_i32_53 : i32
    %216 = tpu.assume_multiple %215, 8 : i32
    %217 = arith.index_cast %216 : i32 to index
    %c0_54 = arith.constant 0 : index
    %218 = vector.load %arg12[%217, %c0_54] : memref<64x128xf32, #tpu.memory_space<vmem>>, vector<8x128xf32>
    %cst_55 = arith.constant dense<0.000000e+00> : vector<8x128xf32>
    %219 = tpu.matmul %189, %22, %cst_55 {dimension_numbers = #tpu.dot_dimension_numbers<[1], [0], [0], [1], [0, 0, 1, 1], [], []>} : vector<8x32xf32>, vector<32x128xf32>, vector<8x128xf32> -> vector<8x128xf32>
    %220 = arith.addf %218, %219 : vector<8x128xf32>
    %221 = arith.negf %220 : vector<8x128xf32>
    %222 = math.exp %221 : vector<8x128xf32>
    %cst_56 = arith.constant 1.000000e+00 : f32
    %223 = vector.broadcast %cst_56 : f32 to vector<8x128xf32>
    %224 = arith.addf %223, %222 : vector<8x128xf32>
    %225 = arith.divf %223, %224 : vector<8x128xf32>
    %226 = vector.extract_strided_slice %225 {offsets = [0, 0], sizes = [8, 32], strides = [1, 1]} : vector<8x128xf32> to vector<8x32xf32>
    %227 = vector.extract_strided_slice %225 {offsets = [0, 32], sizes = [8, 32], strides = [1, 1]} : vector<8x128xf32> to vector<8x32xf32>
    %228 = vector.extract_strided_slice %220 {offsets = [0, 64], sizes = [8, 32], strides = [1, 1]} : vector<8x128xf32> to vector<8x32xf32>
    %229 = vector.extract_strided_slice %220 {offsets = [0, 96], sizes = [8, 32], strides = [1, 1]} : vector<8x128xf32> to vector<8x32xf32>
    %230 = arith.mulf %226, %229 : vector<8x32xf32>
    %231 = arith.addf %228, %230 : vector<8x32xf32>
    %232 = math.tanh %231 : vector<8x32xf32>
    %cst_57 = arith.constant 1.000000e+00 : f32
    %233 = vector.broadcast %cst_57 : f32 to vector<8x32xf32>
    %234 = arith.subf %233, %227 : vector<8x32xf32>
    %235 = arith.mulf %234, %232 : vector<8x32xf32>
    %236 = arith.mulf %227, %189 : vector<8x32xf32>
    %237 = arith.addf %235, %236 : vector<8x32xf32>
    %238 = vector.broadcast %12 : vector<1x32xf32> to vector<8x32xf32>
    %239 = arith.mulf %237, %238 : vector<8x32xf32>
    %cst_58 = arith.constant dense<0.000000e+00> : vector<8xf32>
    %240 = vector.multi_reduction <add>, %239, %cst_58 [1] : vector<8x32xf32> to vector<8xf32>
    %241 = vector.shape_cast %240 : vector<8xf32> to vector<8x1xf32>
    %242 = vector.broadcast %241 : vector<8x1xf32> to vector<8x2xf32>
    %243 = arith.addf %21, %242 : vector<8x2xf32>
    %244 = math.tanh %243 : vector<8x2xf32>
    %245 = math.exp %244 : vector<8x2xf32>
    %cst_59 = arith.constant dense<0.000000e+00> : vector<8xf32>
    %246 = vector.multi_reduction <add>, %245, %cst_59 [1] : vector<8x2xf32> to vector<8xf32>
    %247 = vector.shape_cast %246 : vector<8xf32> to vector<8x1xf32>
    %cst_60 = arith.constant 9.99999997E-7 : f32
    %248 = vector.broadcast %cst_60 : f32 to vector<8x1xf32>
    %249 = arith.addf %247, %248 : vector<8x1xf32>
    %250 = tpu.reciprocal %249 {approx = true} : vector<8x1xf32> -> vector<8x1xf32>
    %251 = vector.extract_strided_slice %245 {offsets = [0, 0], sizes = [8, 1], strides = [1, 1]} : vector<8x2xf32> to vector<8x1xf32>
    %252 = arith.mulf %251, %250 : vector<8x1xf32>
    %253 = vector.broadcast %252 : vector<8x1xf32> to vector<8x16xf32>
    %254 = arith.mulf %253, %0 : vector<8x16xf32>
    %255 = vector.extract_strided_slice %245 {offsets = [0, 1], sizes = [8, 1], strides = [1, 1]} : vector<8x2xf32> to vector<8x1xf32>
    %256 = arith.mulf %255, %250 : vector<8x1xf32>
    %257 = vector.broadcast %256 : vector<8x1xf32> to vector<8x16xf32>
    %258 = arith.mulf %257, %1 : vector<8x16xf32>
    %259 = arith.addf %254, %258 : vector<8x16xf32>
    %260 = tpu.concatenate %237, %259 in 1 : vector<8x32xf32>, vector<8x16xf32> -> vector<8x48xf32>
    %261 = arith.index_cast %216 : i32 to index
    %c0_61 = arith.constant 0 : index
    %262 = vector.load %arg13[%261, %c0_61] : memref<64x48xf32, #tpu.memory_space<vmem>>, vector<8x48xf32>
    tpu.vector_store %arg13[%261, %c0_61], %260 {strides = array<i32>} : memref<64x48xf32, #tpu.memory_space<vmem>>, vector<8x48xf32>,
    %c5_i32 = arith.constant 5 : i32
    %c8_i32_62 = arith.constant 8 : i32
    %263 = arith.muli %c5_i32, %c8_i32_62 : i32
    %264 = tpu.assume_multiple %263, 8 : i32
    %265 = arith.index_cast %264 : i32 to index
    %c0_63 = arith.constant 0 : index
    %266 = vector.load %arg12[%265, %c0_63] : memref<64x128xf32, #tpu.memory_space<vmem>>, vector<8x128xf32>
    %cst_64 = arith.constant dense<0.000000e+00> : vector<8x128xf32>
    %267 = tpu.matmul %237, %22, %cst_64 {dimension_numbers = #tpu.dot_dimension_numbers<[1], [0], [0], [1], [0, 0, 1, 1], [], []>} : vector<8x32xf32>, vector<32x128xf32>, vector<8x128xf32> -> vector<8x128xf32>
    %268 = arith.addf %266, %267 : vector<8x128xf32>
    %269 = arith.negf %268 : vector<8x128xf32>
    %270 = math.exp %269 : vector<8x128xf32>
    %cst_65 = arith.constant 1.000000e+00 : f32
    %271 = vector.broadcast %cst_65 : f32 to vector<8x128xf32>
    %272 = arith.addf %271, %270 : vector<8x128xf32>
    %273 = arith.divf %271, %272 : vector<8x128xf32>
    %274 = vector.extract_strided_slice %273 {offsets = [0, 0], sizes = [8, 32], strides = [1, 1]} : vector<8x128xf32> to vector<8x32xf32>
    %275 = vector.extract_strided_slice %273 {offsets = [0, 32], sizes = [8, 32], strides = [1, 1]} : vector<8x128xf32> to vector<8x32xf32>
    %276 = vector.extract_strided_slice %268 {offsets = [0, 64], sizes = [8, 32], strides = [1, 1]} : vector<8x128xf32> to vector<8x32xf32>
    %277 = vector.extract_strided_slice %268 {offsets = [0, 96], sizes = [8, 32], strides = [1, 1]} : vector<8x128xf32> to vector<8x32xf32>
    %278 = arith.mulf %274, %277 : vector<8x32xf32>
    %279 = arith.addf %276, %278 : vector<8x32xf32>
    %280 = math.tanh %279 : vector<8x32xf32>
    %cst_66 = arith.constant 1.000000e+00 : f32
    %281 = vector.broadcast %cst_66 : f32 to vector<8x32xf32>
    %282 = arith.subf %281, %275 : vector<8x32xf32>
    %283 = arith.mulf %282, %280 : vector<8x32xf32>
    %284 = arith.mulf %275, %237 : vector<8x32xf32>
    %285 = arith.addf %283, %284 : vector<8x32xf32>
    %286 = vector.broadcast %12 : vector<1x32xf32> to vector<8x32xf32>
    %287 = arith.mulf %285, %286 : vector<8x32xf32>
    %cst_67 = arith.constant dense<0.000000e+00> : vector<8xf32>
    %288 = vector.multi_reduction <add>, %287, %cst_67 [1] : vector<8x32xf32> to vector<8xf32>
    %289 = vector.shape_cast %288 : vector<8xf32> to vector<8x1xf32>
    %290 = vector.broadcast %289 : vector<8x1xf32> to vector<8x2xf32>
    %291 = arith.addf %21, %290 : vector<8x2xf32>
    %292 = math.tanh %291 : vector<8x2xf32>
    %293 = math.exp %292 : vector<8x2xf32>
    %cst_68 = arith.constant dense<0.000000e+00> : vector<8xf32>
    %294 = vector.multi_reduction <add>, %293, %cst_68 [1] : vector<8x2xf32> to vector<8xf32>
    %295 = vector.shape_cast %294 : vector<8xf32> to vector<8x1xf32>
    %cst_69 = arith.constant 9.99999997E-7 : f32
    %296 = vector.broadcast %cst_69 : f32 to vector<8x1xf32>
    %297 = arith.addf %295, %296 : vector<8x1xf32>
    %298 = tpu.reciprocal %297 {approx = true} : vector<8x1xf32> -> vector<8x1xf32>
    %299 = vector.extract_strided_slice %293 {offsets = [0, 0], sizes = [8, 1], strides = [1, 1]} : vector<8x2xf32> to vector<8x1xf32>
    %300 = arith.mulf %299, %298 : vector<8x1xf32>
    %301 = vector.broadcast %300 : vector<8x1xf32> to vector<8x16xf32>
    %302 = arith.mulf %301, %0 : vector<8x16xf32>
    %303 = vector.extract_strided_slice %293 {offsets = [0, 1], sizes = [8, 1], strides = [1, 1]} : vector<8x2xf32> to vector<8x1xf32>
    %304 = arith.mulf %303, %298 : vector<8x1xf32>
    %305 = vector.broadcast %304 : vector<8x1xf32> to vector<8x16xf32>
    %306 = arith.mulf %305, %1 : vector<8x16xf32>
    %307 = arith.addf %302, %306 : vector<8x16xf32>
    %308 = tpu.concatenate %285, %307 in 1 : vector<8x32xf32>, vector<8x16xf32> -> vector<8x48xf32>
    %309 = arith.index_cast %264 : i32 to index
    %c0_70 = arith.constant 0 : index
    %310 = vector.load %arg13[%309, %c0_70] : memref<64x48xf32, #tpu.memory_space<vmem>>, vector<8x48xf32>
    tpu.vector_store %arg13[%309, %c0_70], %308 {strides = array<i32>} : memref<64x48xf32, #tpu.memory_space<vmem>>, vector<8x48xf32>,
    %c6_i32 = arith.constant 6 : i32
    %c8_i32_71 = arith.constant 8 : i32
    %311 = arith.muli %c6_i32, %c8_i32_71 : i32
    %312 = tpu.assume_multiple %311, 8 : i32
    %313 = arith.index_cast %312 : i32 to index
    %c0_72 = arith.constant 0 : index
    %314 = vector.load %arg12[%313, %c0_72] : memref<64x128xf32, #tpu.memory_space<vmem>>, vector<8x128xf32>
    %cst_73 = arith.constant dense<0.000000e+00> : vector<8x128xf32>
    %315 = tpu.matmul %285, %22, %cst_73 {dimension_numbers = #tpu.dot_dimension_numbers<[1], [0], [0], [1], [0, 0, 1, 1], [], []>} : vector<8x32xf32>, vector<32x128xf32>, vector<8x128xf32> -> vector<8x128xf32>
    %316 = arith.addf %314, %315 : vector<8x128xf32>
    %317 = arith.negf %316 : vector<8x128xf32>
    %318 = math.exp %317 : vector<8x128xf32>
    %cst_74 = arith.constant 1.000000e+00 : f32
    %319 = vector.broadcast %cst_74 : f32 to vector<8x128xf32>
    %320 = arith.addf %319, %318 : vector<8x128xf32>
    %321 = arith.divf %319, %320 : vector<8x128xf32>
    %322 = vector.extract_strided_slice %321 {offsets = [0, 0], sizes = [8, 32], strides = [1, 1]} : vector<8x128xf32> to vector<8x32xf32>
    %323 = vector.extract_strided_slice %321 {offsets = [0, 32], sizes = [8, 32], strides = [1, 1]} : vector<8x128xf32> to vector<8x32xf32>
    %324 = vector.extract_strided_slice %316 {offsets = [0, 64], sizes = [8, 32], strides = [1, 1]} : vector<8x128xf32> to vector<8x32xf32>
    %325 = vector.extract_strided_slice %316 {offsets = [0, 96], sizes = [8, 32], strides = [1, 1]} : vector<8x128xf32> to vector<8x32xf32>
    %326 = arith.mulf %322, %325 : vector<8x32xf32>
    %327 = arith.addf %324, %326 : vector<8x32xf32>
    %328 = math.tanh %327 : vector<8x32xf32>
    %cst_75 = arith.constant 1.000000e+00 : f32
    %329 = vector.broadcast %cst_75 : f32 to vector<8x32xf32>
    %330 = arith.subf %329, %323 : vector<8x32xf32>
    %331 = arith.mulf %330, %328 : vector<8x32xf32>
    %332 = arith.mulf %323, %285 : vector<8x32xf32>
    %333 = arith.addf %331, %332 : vector<8x32xf32>
    %334 = vector.broadcast %12 : vector<1x32xf32> to vector<8x32xf32>
    %335 = arith.mulf %333, %334 : vector<8x32xf32>
    %cst_76 = arith.constant dense<0.000000e+00> : vector<8xf32>
    %336 = vector.multi_reduction <add>, %335, %cst_76 [1] : vector<8x32xf32> to vector<8xf32>
    %337 = vector.shape_cast %336 : vector<8xf32> to vector<8x1xf32>
    %338 = vector.broadcast %337 : vector<8x1xf32> to vector<8x2xf32>
    %339 = arith.addf %21, %338 : vector<8x2xf32>
    %340 = math.tanh %339 : vector<8x2xf32>
    %341 = math.exp %340 : vector<8x2xf32>
    %cst_77 = arith.constant dense<0.000000e+00> : vector<8xf32>
    %342 = vector.multi_reduction <add>, %341, %cst_77 [1] : vector<8x2xf32> to vector<8xf32>
    %343 = vector.shape_cast %342 : vector<8xf32> to vector<8x1xf32>
    %cst_78 = arith.constant 9.99999997E-7 : f32
    %344 = vector.broadcast %cst_78 : f32 to vector<8x1xf32>
    %345 = arith.addf %343, %344 : vector<8x1xf32>
    %346 = tpu.reciprocal %345 {approx = true} : vector<8x1xf32> -> vector<8x1xf32>
    %347 = vector.extract_strided_slice %341 {offsets = [0, 0], sizes = [8, 1], strides = [1, 1]} : vector<8x2xf32> to vector<8x1xf32>
    %348 = arith.mulf %347, %346 : vector<8x1xf32>
    %349 = vector.broadcast %348 : vector<8x1xf32> to vector<8x16xf32>
    %350 = arith.mulf %349, %0 : vector<8x16xf32>
    %351 = vector.extract_strided_slice %341 {offsets = [0, 1], sizes = [8, 1], strides = [1, 1]} : vector<8x2xf32> to vector<8x1xf32>
    %352 = arith.mulf %351, %346 : vector<8x1xf32>
    %353 = vector.broadcast %352 : vector<8x1xf32> to vector<8x16xf32>
    %354 = arith.mulf %353, %1 : vector<8x16xf32>
    %355 = arith.addf %350, %354 : vector<8x16xf32>
    %356 = tpu.concatenate %333, %355 in 1 : vector<8x32xf32>, vector<8x16xf32> -> vector<8x48xf32>
    %357 = arith.index_cast %312 : i32 to index
    %c0_79 = arith.constant 0 : index
    %358 = vector.load %arg13[%357, %c0_79] : memref<64x48xf32, #tpu.memory_space<vmem>>, vector<8x48xf32>
    tpu.vector_store %arg13[%357, %c0_79], %356 {strides = array<i32>} : memref<64x48xf32, #tpu.memory_space<vmem>>, vector<8x48xf32>,
    %c7_i32 = arith.constant 7 : i32
    %c8_i32_80 = arith.constant 8 : i32
    %359 = arith.muli %c7_i32, %c8_i32_80 : i32
    %360 = tpu.assume_multiple %359, 8 : i32
    %361 = arith.index_cast %360 : i32 to index
    %c0_81 = arith.constant 0 : index
    %362 = vector.load %arg12[%361, %c0_81] : memref<64x128xf32, #tpu.memory_space<vmem>>, vector<8x128xf32>
    %cst_82 = arith.constant dense<0.000000e+00> : vector<8x128xf32>
    %363 = tpu.matmul %333, %22, %cst_82 {dimension_numbers = #tpu.dot_dimension_numbers<[1], [0], [0], [1], [0, 0, 1, 1], [], []>} : vector<8x32xf32>, vector<32x128xf32>, vector<8x128xf32> -> vector<8x128xf32>
    %364 = arith.addf %362, %363 : vector<8x128xf32>
    %365 = arith.negf %364 : vector<8x128xf32>
    %366 = math.exp %365 : vector<8x128xf32>
    %cst_83 = arith.constant 1.000000e+00 : f32
    %367 = vector.broadcast %cst_83 : f32 to vector<8x128xf32>
    %368 = arith.addf %367, %366 : vector<8x128xf32>
    %369 = arith.divf %367, %368 : vector<8x128xf32>
    %370 = vector.extract_strided_slice %369 {offsets = [0, 0], sizes = [8, 32], strides = [1, 1]} : vector<8x128xf32> to vector<8x32xf32>
    %371 = vector.extract_strided_slice %369 {offsets = [0, 32], sizes = [8, 32], strides = [1, 1]} : vector<8x128xf32> to vector<8x32xf32>
    %372 = vector.extract_strided_slice %364 {offsets = [0, 64], sizes = [8, 32], strides = [1, 1]} : vector<8x128xf32> to vector<8x32xf32>
    %373 = vector.extract_strided_slice %364 {offsets = [0, 96], sizes = [8, 32], strides = [1, 1]} : vector<8x128xf32> to vector<8x32xf32>
    %374 = arith.mulf %370, %373 : vector<8x32xf32>
    %375 = arith.addf %372, %374 : vector<8x32xf32>
    %376 = math.tanh %375 : vector<8x32xf32>
    %cst_84 = arith.constant 1.000000e+00 : f32
    %377 = vector.broadcast %cst_84 : f32 to vector<8x32xf32>
    %378 = arith.subf %377, %371 : vector<8x32xf32>
    %379 = arith.mulf %378, %376 : vector<8x32xf32>
    %380 = arith.mulf %371, %333 : vector<8x32xf32>
    %381 = arith.addf %379, %380 : vector<8x32xf32>
    %382 = vector.broadcast %12 : vector<1x32xf32> to vector<8x32xf32>
    %383 = arith.mulf %381, %382 : vector<8x32xf32>
    %cst_85 = arith.constant dense<0.000000e+00> : vector<8xf32>
    %384 = vector.multi_reduction <add>, %383, %cst_85 [1] : vector<8x32xf32> to vector<8xf32>
    %385 = vector.shape_cast %384 : vector<8xf32> to vector<8x1xf32>
    %386 = vector.broadcast %385 : vector<8x1xf32> to vector<8x2xf32>
    %387 = arith.addf %21, %386 : vector<8x2xf32>
    %388 = math.tanh %387 : vector<8x2xf32>
    %389 = math.exp %388 : vector<8x2xf32>
    %cst_86 = arith.constant dense<0.000000e+00> : vector<8xf32>
    %390 = vector.multi_reduction <add>, %389, %cst_86 [1] : vector<8x2xf32> to vector<8xf32>
    %391 = vector.shape_cast %390 : vector<8xf32> to vector<8x1xf32>
    %cst_87 = arith.constant 9.99999997E-7 : f32
    %392 = vector.broadcast %cst_87 : f32 to vector<8x1xf32>
    %393 = arith.addf %391, %392 : vector<8x1xf32>
    %394 = tpu.reciprocal %393 {approx = true} : vector<8x1xf32> -> vector<8x1xf32>
    %395 = vector.extract_strided_slice %389 {offsets = [0, 0], sizes = [8, 1], strides = [1, 1]} : vector<8x2xf32> to vector<8x1xf32>
    %396 = arith.mulf %395, %394 : vector<8x1xf32>
    %397 = vector.broadcast %396 : vector<8x1xf32> to vector<8x16xf32>
    %398 = arith.mulf %397, %0 : vector<8x16xf32>
    %399 = vector.extract_strided_slice %389 {offsets = [0, 1], sizes = [8, 1], strides = [1, 1]} : vector<8x2xf32> to vector<8x1xf32>
    %400 = arith.mulf %399, %394 : vector<8x1xf32>
    %401 = vector.broadcast %400 : vector<8x1xf32> to vector<8x16xf32>
    %402 = arith.mulf %401, %1 : vector<8x16xf32>
    %403 = arith.addf %398, %402 : vector<8x16xf32>
    %404 = tpu.concatenate %381, %403 in 1 : vector<8x32xf32>, vector<8x16xf32> -> vector<8x48xf32>
    %405 = arith.index_cast %360 : i32 to index
    %c0_88 = arith.constant 0 : index
    %406 = vector.load %arg13[%405, %c0_88] : memref<64x48xf32, #tpu.memory_space<vmem>>, vector<8x48xf32>
    tpu.vector_store %arg13[%405, %c0_88], %404 {strides = array<i32>} : memref<64x48xf32, #tpu.memory_space<vmem>>, vector<8x48xf32>,
    %c8_i32_89 = arith.constant 8 : i32
    %c0_90 = arith.constant 0 : index
    %c0_91 = arith.constant 0 : index
    %407 = vector.load %arg13[%c0_90, %c0_91] : memref<64x48xf32, #tpu.memory_space<vmem>>, vector<64x48xf32>
    %c0_92 = arith.constant 0 : index
    %c0_93 = arith.constant 0 : index
    %408 = vector.load %arg9[%c0_92, %c0_93] : memref<48x128xf32, #tpu.memory_space<vmem>>, vector<48x128xf32>
    %cst_94 = arith.constant dense<0.000000e+00> : vector<64x128xf32>
    %409 = tpu.matmul %407, %408, %cst_94 {dimension_numbers = #tpu.dot_dimension_numbers<[1], [0], [0], [1], [0, 0, 1, 1], [], []>} : vector<64x48xf32>, vector<48x128xf32>, vector<64x128xf32> -> vector<64x128xf32>
    %c0_95 = arith.constant 0 : index
    %c0_96 = arith.constant 0 : index
    %410 = vector.load %arg10[%c0_95, %c0_96] : memref<64x128xf32, #tpu.memory_space<vmem>>, vector<64x128xf32>
    tpu.vector_store %arg10[%c0_95, %c0_96], %409 {strides = array<i32>} : memref<64x128xf32, #tpu.memory_space<vmem>>, vector<64x128xf32>,
    %c0_97 = arith.constant 0 : index
    %c0_98 = arith.constant 0 : index
    %411 = vector.load %arg2[%c0_97, %c0_98] : memref<64x1xi32, #tpu.memory_space<vmem>>, vector<64x1xi32>
    %412 = tpu.iota {dimensions = array<i32: 1>} : vector<1x128xi32>
    %c64_i32 = arith.constant 64 : i32
    %413 = vector.broadcast %c64_i32 : i32 to vector<1x128xi32>
    %414 = arith.cmpi slt, %412, %413 : vector<1x128xi32>
    %cst_99 = arith.constant 0.000000e+00 : f32
    %cst_100 = arith.constant -1.000000e+30 : f32
    %415 = vector.broadcast %cst_99 : f32 to vector<1x128xf32>
    %416 = vector.broadcast %cst_100 : f32 to vector<1x128xf32>
    %417 = arith.select %414, %415, %416 : vector<1x128xi1>, vector<1x128xf32>
    %418 = vector.broadcast %417 : vector<1x128xf32> to vector<64x128xf32>
    %419 = arith.addf %409, %418 : vector<64x128xf32>
    %cst_101 = arith.constant dense<0xFF800000> : vector<64xf32>
    %420 = vector.multi_reduction <maximumf>, %419, %cst_101 [1] : vector<64x128xf32> to vector<64xf32>
    %421 = vector.shape_cast %420 : vector<64xf32> to vector<64x1xf32>
    %422 = vector.broadcast %421 : vector<64x1xf32> to vector<64x128xf32>
    %423 = arith.subf %419, %422 : vector<64x128xf32>
    %424 = math.exp %423 : vector<64x128xf32>
    %cst_102 = arith.constant dense<0.000000e+00> : vector<64xf32>
    %425 = vector.multi_reduction <add>, %424, %cst_102 [1] : vector<64x128xf32> to vector<64xf32>
    %426 = vector.shape_cast %425 : vector<64xf32> to vector<64x1xf32>
    %427 = math.log %426 : vector<64x1xf32>
    %428 = arith.addf %421, %427 : vector<64x1xf32>
    %429 = tpu.iota {dimensions = array<i32: 1>} : vector<64x128xi32>
    %430 = vector.broadcast %411 : vector<64x1xi32> to vector<64x128xi32>
    %431 = arith.cmpi eq, %429, %430 : vector<64x128xi32>
    %cst_103 = arith.constant 0.000000e+00 : f32
    %432 = vector.broadcast %cst_103 : f32 to vector<64x128xf32>
    %433 = arith.select %431, %409, %432 : vector<64x128xi1>, vector<64x128xf32>
    %cst_104 = arith.constant dense<0.000000e+00> : vector<64xf32>
    %434 = vector.multi_reduction <add>, %433, %cst_104 [1] : vector<64x128xf32> to vector<64xf32>
    %435 = vector.shape_cast %434 : vector<64xf32> to vector<64x1xf32>
    %c0_i32_105 = arith.constant 0 : i32
    %436 = vector.broadcast %c0_i32_105 : i32 to vector<64x1xi32>
    %437 = arith.cmpi eq, %411, %436 : vector<64x1xi32>
    %438 = arith.subf %428, %435 : vector<64x1xf32>
    %cst_106 = arith.constant 0.000000e+00 : f32
    %439 = vector.broadcast %cst_106 : f32 to vector<64x1xf32>
    %440 = arith.select %437, %439, %438 : vector<64x1xi1>, vector<64x1xf32>
    %c0_107 = arith.constant 0 : index
    %c0_108 = arith.constant 0 : index
    %441 = vector.load %arg11[%c0_107, %c0_108] : memref<64x1xf32, #tpu.memory_space<vmem>>, vector<64x1xf32>
    tpu.vector_store %arg11[%c0_107, %c0_108], %440 {strides = array<i32>} : memref<64x1xf32, #tpu.memory_space<vmem>>, vector<64x1xf32>,
    return
  }
  func.func @transform_0(%arg0: i32) -> (i32, i32) {
    %c0_i32 = arith.constant 0 : i32
    %c0_i32_0 = arith.constant 0 : i32
    %c0_i32_1 = arith.constant 0 : i32
    return %c0_i32, %c0_i32_0 : i32, i32
  }
  func.func @transform_1(%arg0: i32) -> (i32, i32) {
    %c0_i32 = arith.constant 0 : i32
    %c0_i32_0 = arith.constant 0 : i32
    %c0_i32_1 = arith.constant 0 : i32
    return %c0_i32, %c0_i32_0 : i32, i32
  }
  func.func @transform_2(%arg0: i32) -> (i32, i32) {
    %c0_i32 = arith.constant 0 : i32
    %c0_i32_0 = arith.constant 0 : i32
    %c0_i32_1 = arith.constant 0 : i32
    return %c0_i32, %c0_i32_0 : i32, i32
  }
  func.func @transform_3(%arg0: i32) -> (i32, i32) {
    %c0_i32 = arith.constant 0 : i32
    %c0_i32_0 = arith.constant 0 : i32
    %c0_i32_1 = arith.constant 0 : i32
    return %c0_i32, %c0_i32_0 : i32, i32
  }
  func.func @transform_4(%arg0: i32) -> (i32, i32) {
    %c0_i32 = arith.constant 0 : i32
    %c0_i32_0 = arith.constant 0 : i32
    %c0_i32_1 = arith.constant 0 : i32
    return %c0_i32, %c0_i32_0 : i32, i32
  }
  func.func @transform_5(%arg0: i32) -> (i32, i32) {
    %c0_i32 = arith.constant 0 : i32
    %c0_i32_0 = arith.constant 0 : i32
    %c0_i32_1 = arith.constant 0 : i32
    return %c0_i32, %c0_i32_0 : i32, i32
  }
  func.func @transform_6(%arg0: i32) -> (i32, i32) {
    %c0_i32 = arith.constant 0 : i32
    %c0_i32_0 = arith.constant 0 : i32
    %c0_i32_1 = arith.constant 0 : i32
    return %c0_i32, %c0_i32_0 : i32, i32
  }
  func.func @transform_7(%arg0: i32) -> (i32, i32) {
    %c0_i32 = arith.constant 0 : i32
    %c0_i32_0 = arith.constant 0 : i32
    %c0_i32_1 = arith.constant 0 : i32
    return %c0_i32, %c0_i32_0 : i32, i32
  }
  func.func @transform_8(%arg0: i32) -> (i32, i32) {
    %c0_i32 = arith.constant 0 : i32
    %c0_i32_0 = arith.constant 0 : i32
    %c0_i32_1 = arith.constant 0 : i32
    return %c0_i32, %c0_i32_0 : i32, i32
  }
  func.func @transform_9(%arg0: i32) -> (i32, i32) {
    %c0_i32 = arith.constant 0 : i32
    %c0_i32_0 = arith.constant 0 : i32
    %c0_i32_1 = arith.constant 0 : i32
    return %c0_i32, %c0_i32_0 : i32, i32
  }
  func.func @transform_10(%arg0: i32) -> (i32, i32) {
    %c0_i32 = arith.constant 0 : i32
    %c0_i32_0 = arith.constant 0 : i32
    %c0_i32_1 = arith.constant 0 : i32
    return %c0_i32, %c0_i32_0 : i32, i32
  }
}

</mosaic_0001>

<llo_original>
// kernel: tpu_custom_call.1
$region0: #{tpu_custom_call.1}
  #allocation0 [shape = 'u32[]', space=smem, size = 0x4, offset = 0x4, fixed_abs, tag = 'smem constant byte address 0x4 - core index']
  #allocation1 [shape = 'u32[144,128]{1,0:T(1,128)}', space=vmem, size = 0x12000, scoped, tag = 'internal scratch']
  #allocation2 [shape = 'f32[64,128]{1,0:T(8,128)}', space=vmem, size = 0x8000, scoped, tag = 'scratch operand']
  #allocation3 [shape = 'f32[64,48]{1,0:T(8,128)}', space=vmem, size = 0x8000, scoped, tag = 'scratch operand']
  %s0 = inlined_call_operand.vmem [shape: f32[64,32], index: 0, kind: input, shape index: {}]
  %s1 = inlined_call_operand.vmem [shape: s32[64,1], index: 1, kind: input, shape index: {}]
  %s2 = inlined_call_operand.vmem [shape: f32[8,16], index: 2, kind: input, shape index: {}]
  %s3 = inlined_call_operand.vmem [shape: f32[8,16], index: 3, kind: input, shape index: {}]
  %s4 = inlined_call_operand.vmem [shape: f32[16,32], index: 4, kind: input, shape index: {}]
  %s5 = inlined_call_operand.vmem [shape: f32[32,128], index: 5, kind: input, shape index: {}]
  %s6 = inlined_call_operand.vmem [shape: f32[32,128], index: 6, kind: input, shape index: {}]
  %s7 = inlined_call_operand.vmem [shape: f32[1,48], index: 7, kind: input, shape index: {}]
  %s8 = inlined_call_operand.vmem [shape: f32[48,128], index: 8, kind: input, shape index: {}]
  %s9 = inlined_call_operand.hbm [shape: f32[64,128], index: 9, kind: output, shape index: {0}]
  %s10 = inlined_call_operand.vmem [shape: f32[64,1], index: 10, kind: output, shape index: {1}]
  %11 = xla_tuple %s9, %s10
  %s12 = sld [smem:[#allocation0]]
  $region54: #{tpu_custom_call.1} parent=0
    _
  %s14 = ssub.s32 1, %s12
  %s15 = scalar_select 0, %s14, %s12
  $region1: #{tpu_custom_call.1} parent=0
    #allocation4 [shape = 'u8[32768]{0}', space=vmem, size = 0x8000, scoped, tag = 'output window, operand 0, single buffered']
    #allocation5 [shape = 's32[1]{0}', space=sflag, size = 0x4, scoped, tag = 'scoped memory for tpu_custom_call.1']
    %16 = vsyncpa [#allocation5], 0
    // Predicated region
    $region2: #{tpu_custom_call.1} parent=1 // pred_check
      _
    $region3: #{tpu_custom_call.1} parent=1 // pred_check_branch
      %18 = sbr.rel (0) target = $region5
    $region4: #{tpu_custom_call.1} parent=1 // pred_region
      _
    $region5: #{tpu_custom_call.1} parent=1 // pred_fallthru
      _
    // Predicated region
    $region6: #{tpu_custom_call.1} parent=1 // pred_check
      _
    $region7: #{tpu_custom_call.1} parent=1 // pred_check_branch
      %20 = sbr.rel (0) target = $region9
    $region8: #{tpu_custom_call.1} parent=1 // pred_region
      _
    $region9: #{tpu_custom_call.1} parent=1 // pred_fallthru
      _
    // Predicated region
    $region10: #{tpu_custom_call.1} parent=1 // pred_check
      _
    $region11: #{tpu_custom_call.1} parent=1 // pred_check_branch
      %22 = sbr.rel (0) target = $region13
    $region12: #{tpu_custom_call.1} parent=1 // pred_region
      _
    $region13: #{tpu_custom_call.1} parent=1 // pred_fallthru
      _
    // Predicated region
    $region14: #{tpu_custom_call.1} parent=1 // pred_check
      _
    $region15: #{tpu_custom_call.1} parent=1 // pred_check_branch
      %24 = sbr.rel (0) target = $region17
    $region16: #{tpu_custom_call.1} parent=1 // pred_region
      _
    $region17: #{tpu_custom_call.1} parent=1 // pred_fallthru
      _
    // Predicated region
    $region18: #{tpu_custom_call.1} parent=1 // pred_check
      _
    $region19: #{tpu_custom_call.1} parent=1 // pred_check_branch
      %26 = sbr.rel (0) target = $region21
    $region20: #{tpu_custom_call.1} parent=1 // pred_region
      _
    $region21: #{tpu_custom_call.1} parent=1 // pred_fallthru
      _
    // Predicated region
    $region22: #{tpu_custom_call.1} parent=1 // pred_check
      _
    $region23: #{tpu_custom_call.1} parent=1 // pred_check_branch
      %28 = sbr.rel (0) target = $region25
    $region24: #{tpu_custom_call.1} parent=1 // pred_region
      _
    $region25: #{tpu_custom_call.1} parent=1 // pred_fallthru
      _
    // Predicated region
    $region26: #{tpu_custom_call.1} parent=1 // pred_check
      _
    $region27: #{tpu_custom_call.1} parent=1 // pred_check_branch
      %30 = sbr.rel (0) target = $region29
    $region28: #{tpu_custom_call.1} parent=1 // pred_region
      _
    $region29: #{tpu_custom_call.1} parent=1 // pred_fallthru
      _
    // Predicated region
    $region30: #{tpu_custom_call.1} parent=1 // pred_check
      _
    $region31: #{tpu_custom_call.1} parent=1 // pred_check_branch
      %32 = sbr.rel (0) target = $region33
    $region32: #{tpu_custom_call.1} parent=1 // pred_region
      _
    $region33: #{tpu_custom_call.1} parent=1 // pred_fallthru
      _
    // Predicated region
    $region34: #{tpu_custom_call.1} parent=1 // pred_check
      _
    $region35: #{tpu_custom_call.1} parent=1 // pred_check_branch
      %34 = sbr.rel (0) target = $region37
    $region36: #{tpu_custom_call.1} parent=1 // pred_region
      _
    $region37: #{tpu_custom_call.1} parent=1 // pred_fallthru
      _
    %v35 = vld [vmem:[%s2] sm:$0xff]
    %v36 = vld [vmem:[%s3] sm:$0xff]
    %v37 = vadd.f32 %v35, %v36
    %v38 = vld [vmem:[%s4] sm:$0xff]
    %v39 = vld [vmem:[%s4 + $0x8] sm:$0xff]
    %vm40 = vcmask 130048
    %v42 = vsel %vm40, %v37, 0
    %44 = vmatprep.subr.mxu0 0.0
    %45 = vmatpush1.msra.mxu0 %v38
    %46 = vmatprep.subr.mxu0 0.0
    %47 = vmatpush1.msra.mxu0 %v39
    %48 = vmatprep.subr.mxu0 0.0
    %49 = vmatpush1.msra.mxu0 0.0
    %50 = vmatprep.subr.mxu0 0.0
    %51 = vmatpush1.msra.mxu0 0.0
    %52 = vmatprep.subr.mxu0 0.0
    %53 = vmatpush1.msra.mxu0 0.0
    %54 = vmatprep.subr.mxu0 0.0
    %55 = vmatpush1.msra.mxu0 0.0
    %56 = vmatprep.subr.mxu0 0.0
    %57 = vmatpush1.msra.mxu0 0.0
    %58 = vmatprep.subr.mxu0 0.0
    %59 = vmatpush1.msra.mxu0 0.0
    %60 = vmatprep.subr.mxu0 0.0
    %61 = vmatpush1.msra.mxu0 0.0
    %62 = vmatprep.subr.mxu0 0.0
    %63 = vmatpush1.msra.mxu0 0.0
    %64 = vmatprep.subr.mxu0 0.0
    %65 = vmatpush1.msra.mxu0 0.0
    %66 = vmatprep.subr.mxu0 0.0
    %67 = vmatpush1.msra.mxu0 0.0
    %68 = vmatprep.subr.mxu0 0.0
    %69 = vmatpush1.msra.mxu0 0.0
    %70 = vmatprep.subr.mxu0 0.0
    %71 = vmatpush1.msra.mxu0 0.0
    %72 = vmatprep.subr.mxu0 0.0
    %73 = vmatpush1.msra.mxu0 0.0
    %74 = vmatprep.subr.mxu0 0.0
    %75 = vmatpush1.msra.mxu0 0.0
    %76 = vmatprep.subr.mxu0 0.0
    %77 = vmatpush1.msra.mxu0 0.0
    %78 = vmatprep.subr.mxu0 0.0
    %79 = vmatpush1.msra.mxu0 0.0
    %80 = vmatprep.subr.mxu0 0.0
    %81 = vmatpush1.msra.mxu0 0.0
    %82 = vmatprep.subr.mxu0 0.0
    %83 = vmatpush1.msra.mxu0 0.0
    %84 = vmatprep.subr.mxu0 0.0
    %85 = vmatpush1.msra.mxu0 0.0
    %86 = vmatprep.subr.mxu0 0.0
    %87 = vmatpush1.msra.mxu0 0.0
    %88 = vmatprep.subr.mxu0 0.0
    %89 = vmatpush1.msra.mxu0 0.0
    %90 = vmatprep.subr.mxu0 0.0
    %91 = vmatpush1.msra.mxu0 0.0
    %92 = vmatprep.subr.mxu0 0.0
    %93 = vmatpush1.msra.mxu0 0.0
    %94 = vmatprep.subr.mxu0 0.0
    %95 = vmatpush1.msra.mxu0 0.0
    %96 = vmatprep.subr.mxu0 0.0
    %97 = vmatpush1.msra.mxu0 0.0
    %98 = vmatprep.subr.mxu0 0.0
    %99 = vmatpush1.msra.mxu0 0.0
    %100 = vmatprep.subr.mxu0 0.0
    %101 = vmatpush1.msra.mxu0 0.0
    %102 = vmatprep.subr.mxu0 0.0
    %103 = vmatpush1.msra.mxu0 0.0
    %104 = vmatprep.subr.mxu0 0.0
    %105 = vmatpush1.msra.mxu0 0.0
    %106 = vmatprep.subr.mxu0 0.0
    %107 = vmatpush1.msra.mxu0 0.0
    %108 = vmatprep.mubr.f32.mxu0 0.0
    %109 = vmatmul.mubr.f32.gmra.mrb[0].mxu0 %v42
    %v110 = vpop.f32.mrb[0].mxu0
    %v111 = vadd.f32 0.0, %v110
    %v112 = vpop.f32.mrb[0].mxu0
    %113 = vdwg.mxu0
    %v114 = vtanh.pop %v111
    %v115 = vld [vmem:[%s0] sm:$0xff]
    %v116 = vld [vmem:[%s0 + $0x8] sm:$0xff]
    %v117 = vld [vmem:[%s0 + $0x10] sm:$0xff]
    %v118 = vld [vmem:[%s0 + $0x18] sm:$0xff]
    %v119 = vld [vmem:[%s0 + $0x20] sm:$0xff]
    %v120 = vld [vmem:[%s0 + $0x28] sm:$0xff]
    %v121 = vld [vmem:[%s0 + $0x30] sm:$0xff]
    %v122 = vld [vmem:[%s0 + $0x38] sm:$0xff]
    %v123 = vld [vmem:[%s5] sm:$0xff]
    %v124 = vld [vmem:[%s5 + $0x8] sm:$0xff]
    %v125 = vld [vmem:[%s5 + $0x10] sm:$0xff]
    %v126 = vld [vmem:[%s5 + $0x18] sm:$0xff]
    %vm127 = vcmask 261120
    %v129 = vsel %vm127, %v115, 0
    %v132 = vsel %vm127, %v116, 0
    %v135 = vsel %vm127, %v117, 0
    %v138 = vsel %vm127, %v118, 0
    %v141 = vsel %vm127, %v119, 0
    %v144 = vsel %vm127, %v120, 0
    %v147 = vsel %vm127, %v121, 0
    %v150 = vsel %vm127, %v122, 0
    %152 = vmatprep.subr.mxu0 0.0
    %153 = vmatpush1.msra.mxu0 %v123
    %154 = vmatprep.subr.mxu0 0.0
    %155 = vmatpush1.msra.mxu0 %v124
    %156 = vmatprep.subr.mxu0 0.0
    %157 = vmatpush1.msra.mxu0 %v125
    %158 = vmatprep.subr.mxu0 0.0
    %159 = vmatpush1.msra.mxu0 %v126
    %160 = vmatprep.subr.mxu0 0.0
    %161 = vmatpush1.msra.mxu0 0.0
    %162 = vmatprep.subr.mxu0 0.0
    %163 = vmatpush1.msra.mxu0 0.0
    %164 = vmatprep.subr.mxu0 0.0
    %165 = vmatpush1.msra.mxu0 0.0
    %166 = vmatprep.subr.mxu0 0.0
    %167 = vmatpush1.msra.mxu0 0.0
    %168 = vmatprep.subr.mxu0 0.0
    %169 = vmatpush1.msra.mxu0 0.0
    %170 = vmatprep.subr.mxu0 0.0
    %171 = vmatpush1.msra.mxu0 0.0
    %172 = vmatprep.subr.mxu0 0.0
    %173 = vmatpush1.msra.mxu0 0.0
    %174 = vmatprep.subr.mxu0 0.0
    %175 = vmatpush1.msra.mxu0 0.0
    %176 = vmatprep.subr.mxu0 0.0
    %177 = vmatpush1.msra.mxu0 0.0
    %178 = vmatprep.subr.mxu0 0.0
    %179 = vmatpush1.msra.mxu0 0.0
    %180 = vmatprep.subr.mxu0 0.0
    %181 = vmatpush1.msra.mxu0 0.0
    %182 = vmatprep.subr.mxu0 0.0
    %183 = vmatpush1.msra.mxu0 0.0
    %184 = vmatprep.subr.mxu0 0.0
    %185 = vmatpush1.msra.mxu0 0.0
    %186 = vmatprep.subr.mxu0 0.0
    %187 = vmatpush1.msra.mxu0 0.0
    %188 = vmatprep.subr.mxu0 0.0
    %189 = vmatpush1.msra.mxu0 0.0
    %190 = vmatprep.subr.mxu0 0.0
    %191 = vmatpush1.msra.mxu0 0.0
    %192 = vmatprep.subr.mxu0 0.0
    %193 = vmatpush1.msra.mxu0 0.0
    %194 = vmatprep.subr.mxu0 0.0
    %195 = vmatpush1.msra.mxu0 0.0
    %196 = vmatprep.subr.mxu0 0.0
    %197 = vmatpush1.msra.mxu0 0.0
    %198 = vmatprep.subr.mxu0 0.0
    %199 = vmatpush1.msra.mxu0 0.0
    %200 = vmatprep.subr.mxu0 0.0
    %201 = vmatpush1.msra.mxu0 0.0
    %202 = vmatprep.subr.mxu0 0.0
    %203 = vmatpush1.msra.mxu0 0.0
    %204 = vmatprep.subr.mxu0 0.0
    %205 = vmatpush1.msra.mxu0 0.0
    %206 = vmatprep.subr.mxu0 0.0
    %207 = vmatpush1.msra.mxu0 0.0
    %208 = vmatprep.subr.mxu0 0.0
    %209 = vmatpush1.msra.mxu0 0.0
    %210 = vmatprep.subr.mxu0 0.0
    %211 = vmatpush1.msra.mxu0 0.0
    %212 = vmatprep.subr.mxu0 0.0
    %213 = vmatpush1.msra.mxu0 0.0
    %214 = vmatprep.subr.mxu0 0.0
    %215 = vmatpush1.msra.mxu0 0.0
    %216 = vmatprep.mubr.f32.mxu0 0.0
    %217 = vmatmul.mubr.f32.gmra.mrb[0].mxu0 %v129
    %v218 = vpop.f32.mrb[0].mxu0
    %v219 = vadd.f32 0.0, %v218
    %v220 = vpop.f32.mrb[0].mxu0
    %221 = vmatprep.mubr.f32.mxu0 0.0
    %222 = vmatmul.mubr.f32.gmra.mrb[0].mxu0 %v132
    %v223 = vpop.f32.mrb[0].mxu0
    %v224 = vadd.f32 0.0, %v223
    %v225 = vpop.f32.mrb[0].mxu0
    %226 = vmatprep.mubr.f32.mxu0 0.0
    %227 = vmatmul.mubr.f32.gmra.mrb[0].mxu0 %v135
    %v228 = vpop.f32.mrb[0].mxu0
    %v229 = vadd.f32 0.0, %v228
    %v230 = vpop.f32.mrb[0].mxu0
    %231 = vmatprep.mubr.f32.mxu0 0.0
    %232 = vmatmul.mubr.f32.gmra.mrb[0].mxu0 %v138
    %v233 = vpop.f32.mrb[0].mxu0
    %v234 = vadd.f32 0.0, %v233
    %v235 = vpop.f32.mrb[0].mxu0
    %236 = vmatprep.mubr.f32.mxu0 0.0
    %237 = vmatmul.mubr.f32.gmra.mrb[0].mxu0 %v141
    %v238 = vpop.f32.mrb[0].mxu0
    %v239 = vadd.f32 0.0, %v238
    %v240 = vpop.f32.mrb[0].mxu0
    %241 = vmatprep.mubr.f32.mxu0 0.0
    %242 = vmatmul.mubr.f32.gmra.mrb[0].mxu0 %v144
    %v243 = vpop.f32.mrb[0].mxu0
    %v244 = vadd.f32 0.0, %v243
    %v245 = vpop.f32.mrb[0].mxu0
    %246 = vmatprep.mubr.f32.mxu0 0.0
    %247 = vmatmul.mubr.f32.gmra.mrb[0].mxu0 %v147
    %v248 = vpop.f32.mrb[0].mxu0
    %v249 = vadd.f32 0.0, %v248
    %v250 = vpop.f32.mrb[0].mxu0
    %251 = vmatprep.mubr.f32.mxu0 0.0
    %252 = vmatmul.mubr.f32.gmra.mrb[0].mxu0 %v150
    %v253 = vpop.f32.mrb[0].mxu0
    %v254 = vadd.f32 0.0, %v253
    %v255 = vpop.f32.mrb[0].mxu0
    %256 = vdwg.mxu0
    %257 = vst [vmem:[#allocation2] sm:$0xff] %v219
    %258 = vst [vmem:[#allocation2 + $0x8] sm:$0xff] %v224
    %259 = vst [vmem:[#allocation2 + $0x10] sm:$0xff] %v229
    %260 = vst [vmem:[#allocation2 + $0x18] sm:$0xff] %v234
    %261 = vst [vmem:[#allocation2 + $0x20] sm:$0xff] %v239
    %262 = vst [vmem:[#allocation2 + $0x28] sm:$0xff] %v244
    %263 = vst [vmem:[#allocation2 + $0x30] sm:$0xff] %v249
    %264 = vst [vmem:[#allocation2 + $0x38] sm:$0xff] %v254
    %v265 = vld [vmem:[%s7] sm:$0x1]
    %v267 = vlaneseq
    %v268 = vshrl.u32 %v267, 7
    %v269 = vsub.s32 0, %v268
    %v270 = vrot.slane %v265, %v269
    %v272 = vmul.f32 %v35, %v270
    %v273 = vsel %vm40, %v272, 0.0
    %274 = vadd.xlane.f32.xlu0 %v273
    %v275 = vpop.xlane.xlu0 %274
    %v276 = vmul.f32 %v36, %v270
    %v277 = vsel %vm40, %v276, 0.0
    %278 = vadd.xlane.f32.xlu0 %v277
    %v279 = vpop.xlane.xlu0 %278
    %vm280 = vcmask 7168
    %v281 = vsel %vm280, %v275, %v279
    %v282 = vld [vmem:[%s6] sm:$0xff]
    %v283 = vld [vmem:[%s6 + $0x8] sm:$0xff]
    %v284 = vld [vmem:[%s6 + $0x10] sm:$0xff]
    %v285 = vld [vmem:[%s6 + $0x18] sm:$0xff]
    %v286 = vld [vmem:[#allocation2] sm:$0xff]
    %v288 = vsel %vm127, %v114, 0
    %290 = vmatprep.subr.mxu0 0.0
    %291 = vmatpush1.msra.mxu0 %v282
    %292 = vmatprep.subr.mxu0 0.0
    %293 = vmatpush1.msra.mxu0 %v283
    %294 = vmatprep.subr.mxu0 0.0
    %295 = vmatpush1.msra.mxu0 %v284
    %296 = vmatprep.subr.mxu0 0.0
    %297 = vmatpush1.msra.mxu0 %v285
    %298 = vmatprep.subr.mxu0 0.0
    %299 = vmatpush1.msra.mxu0 0.0
    %300 = vmatprep.subr.mxu0 0.0
    %301 = vmatpush1.msra.mxu0 0.0
    %302 = vmatprep.subr.mxu0 0.0
    %303 = vmatpush1.msra.mxu0 0.0
    %304 = vmatprep.subr.mxu0 0.0
    %305 = vmatpush1.msra.mxu0 0.0
    %306 = vmatprep.subr.mxu0 0.0
    %307 = vmatpush1.msra.mxu0 0.0
    %308 = vmatprep.subr.mxu0 0.0
    %309 = vmatpush1.msra.mxu0 0.0
    %310 = vmatprep.subr.mxu0 0.0
    %311 = vmatpush1.msra.mxu0 0.0
    %312 = vmatprep.subr.mxu0 0.0
    %313 = vmatpush1.msra.mxu0 0.0
    %314 = vmatprep.subr.mxu0 0.0
    %315 = vmatpush1.msra.mxu0 0.0
    %316 = vmatprep.subr.mxu0 0.0
    %317 = vmatpush1.msra.mxu0 0.0
    %318 = vmatprep.subr.mxu0 0.0
    %319 = vmatpush1.msra.mxu0 0.0
    %320 = vmatprep.subr.mxu0 0.0
    %321 = vmatpush1.msra.mxu0 0.0
    %322 = vmatprep.subr.mxu0 0.0
    %323 = vmatpush1.msra.mxu0 0.0
    %324 = vmatprep.subr.mxu0 0.0
    %325 = vmatpush1.msra.mxu0 0.0
    %326 = vmatprep.subr.mxu0 0.0
    %327 = vmatpush1.msra.mxu0 0.0
    %328 = vmatprep.subr.mxu0 0.0
    %329 = vmatpush1.msra.mxu0 0.0
    %330 = vmatprep.subr.mxu0 0.0
    %331 = vmatpush1.msra.mxu0 0.0
    %332 = vmatprep.subr.mxu0 0.0
    %333 = vmatpush1.msra.mxu0 0.0
    %334 = vmatprep.subr.mxu0 0.0
    %335 = vmatpush1.msra.mxu0 0.0
    %336 = vmatprep.subr.mxu0 0.0
    %337 = vmatpush1.msra.mxu0 0.0
    %338 = vmatprep.subr.mxu0 0.0
    %339 = vmatpush1.msra.mxu0 0.0
    %340 = vmatprep.subr.mxu0 0.0
    %341 = vmatpush1.msra.mxu0 0.0
    %342 = vmatprep.subr.mxu0 0.0
    %343 = vmatpush1.msra.mxu0 0.0
    %344 = vmatprep.subr.mxu0 0.0
    %345 = vmatpush1.msra.mxu0 0.0
    %346 = vmatprep.subr.mxu0 0.0
    %347 = vmatpush1.msra.mxu0 0.0
    %348 = vmatprep.subr.mxu0 0.0
    %349 = vmatpush1.msra.mxu0 0.0
    %350 = vmatprep.subr.mxu0 0.0
    %351 = vmatpush1.msra.mxu0 0.0
    %352 = vmatprep.subr.mxu0 0.0
    %353 = vmatpush1.msra.mxu0 0.0
    %354 = vmatprep.mubr.f32.mxu0 0.0
    %355 = vmatmul.mubr.f32.gmra.mrb[0].mxu0 %v288
    %v356 = vpop.f32.mrb[0].mxu0
    %v357 = vadd.f32 0.0, %v356
    %v358 = vpop.f32.mrb[0].mxu0
    %359 = vdwg.mxu0
    %v360 = vadd.f32 %v286, %v357
    %v361 = vxor.u32 %v360, 2147483648
    %v362 = vmul.f32 %v361, 1.442695
    %v363 = vpow.pop %v362
    %v364 = vadd.f32 %v363, 1.0
    %v365 = vrcp.pop %v364
    %v366 = vmul.f32 1.0, %v365
    %368 = vrot.lane.b32.xlu0 %v360, 32
    %v369 = vpop.permute.xlu0 %368
    %v371 = vmul.f32 %v366, %v369
    %373 = vrot.lane.b32.xlu0 %v371, 64
    %v374 = vpop.permute.xlu0 %373
    %v376 = vadd.f32 %v360, %v374
    %v377 = vtanh.pop %v376
    %v378 = vsub.f32 1.0, %v366
    %380 = vrot.lane.b32.xlu0 %v377, 96
    %v381 = vpop.permute.xlu0 %380
    %v383 = vmul.f32 %v378, %v381
    %384 = vrot.lane.b32.xlu0 %v114, 32
    %v385 = vpop.permute.xlu0 %384
    %v387 = vmul.f32 %v366, %v385
    %v388 = vadd.f32 %v383, %v387
    %389 = vrot.lane.b32.xlu0 %v270, 16
    %v390 = vpop.permute.xlu0 %389
    %v392 = vmul.f32 %v388, %v390
    %394 = vrot.lane.b32.xlu0 %v392, 96
    %v395 = vpop.permute.xlu0 %394
    %v397 = vsel %vm127, %v395, 0.0
    %398 = vadd.xlane.f32.xlu0 %v397
    %v399 = vpop.xlane.xlu0 %398
    %v400 = vadd.f32 %v281, %v399
    %v401 = vtanh.pop %v400
    %v402 = vmul.f32 %v401, 1.442695
    %v403 = vpow.pop %v402
    %vm404 = vcmask 15360
    %v405 = vsel %vm404, %v403, 0.0
    %406 = vadd.xlane.f32.xlu0 %v405
    %v407 = vpop.xlane.xlu0 %406
    %v408 = vadd.f32 %v407, 1e-06
    %v409 = vrcp.pop %v408
    %v410 = vmul.f32 %v403, %v409
    %412 = vset.pattern.permute.xlu0 0
    %413 = vperm.xlu0 %412, %v410
    %v414 = vpop.permute.xlu0 %413
    %v416 = vmul.f32 %v414, %v35
    %417 = vset.pattern.permute.xlu0 1
    %418 = vperm.xlu0 %417, %v410
    %v419 = vpop.permute.xlu0 %418
    %v421 = vmul.f32 %v419, %v36
    %v422 = vadd.f32 %v416, %v421
    %424 = vrot.lane.b32.xlu0 %v388, 96
    %v425 = vpop.permute.xlu0 %424
    %428 = vrot.lane.b32.xlu0 %v422, 32
    %v429 = vpop.permute.xlu0 %428
    %v431 = vsel %vm127, %v425, %v429
    %vm432 = vcmask 392192
    %433 = vst.msk [vmem:[#allocation3] sm:$0xff] %vm432, %v431
    %s434 = scalar_lea.vmem [#allocation2], 8
    %v435 = vld [vmem:[%s434] sm:$0xff]
    %v436 = vsel %vm127, %v425, 0
    %438 = vmatprep.subr.mxu0 0.0
    %439 = vmatpush1.msra.mxu0 %v282
    %440 = vmatprep.subr.mxu0 0.0
    %441 = vmatpush1.msra.mxu0 %v283
    %442 = vmatprep.subr.mxu0 0.0
    %443 = vmatpush1.msra.mxu0 %v284
    %444 = vmatprep.subr.mxu0 0.0
    %445 = vmatpush1.msra.mxu0 %v285
    %446 = vmatprep.subr.mxu0 0.0
    %447 = vmatpush1.msra.mxu0 0.0
    %448 = vmatprep.subr.mxu0 0.0
    %449 = vmatpush1.msra.mxu0 0.0
    %450 = vmatprep.subr.mxu0 0.0
    %451 = vmatpush1.msra.mxu0 0.0
    %452 = vmatprep.subr.mxu0 0.0
    %453 = vmatpush1.msra.mxu0 0.0
    %454 = vmatprep.subr.mxu0 0.0
    %455 = vmatpush1.msra.mxu0 0.0
    %456 = vmatprep.subr.mxu0 0.0
    %457 = vmatpush1.msra.mxu0 0.0
    %458 = vmatprep.subr.mxu0 0.0
    %459 = vmatpush1.msra.mxu0 0.0
    %460 = vmatprep.subr.mxu0 0.0
    %461 = vmatpush1.msra.mxu0 0.0
    %462 = vmatprep.subr.mxu0 0.0
    %463 = vmatpush1.msra.mxu0 0.0
    %464 = vmatprep.subr.mxu0 0.0
    %465 = vmatpush1.msra.mxu0 0.0
    %466 = vmatprep.subr.mxu0 0.0
    %467 = vmatpush1.msra.mxu0 0.0
    %468 = vmatprep.subr.mxu0 0.0
    %469 = vmatpush1.msra.mxu0 0.0
    %470 = vmatprep.subr.mxu0 0.0
    %471 = vmatpush1.msra.mxu0 0.0
    %472 = vmatprep.subr.mxu0 0.0
    %473 = vmatpush1.msra.mxu0 0.0
    %474 = vmatprep.subr.mxu0 0.0
    %475 = vmatpush1.msra.mxu0 0.0
    %476 = vmatprep.subr.mxu0 0.0
    %477 = vmatpush1.msra.mxu0 0.0
    %478 = vmatprep.subr.mxu0 0.0
    %479 = vmatpush1.msra.mxu0 0.0
    %480 = vmatprep.subr.mxu0 0.0
    %481 = vmatpush1.msra.mxu0 0.0
    %482 = vmatprep.subr.mxu0 0.0
    %483 = vmatpush1.msra.mxu0 0.0
    %484 = vmatprep.subr.mxu0 0.0
    %485 = vmatpush1.msra.mxu0 0.0
    %486 = vmatprep.subr.mxu0 0.0
    %487 = vmatpush1.msra.mxu0 0.0
    %488 = vmatprep.subr.mxu0 0.0
    %489 = vmatpush1.msra.mxu0 0.0
    %490 = vmatprep.subr.mxu0 0.0
    %491 = vmatpush1.msra.mxu0 0.0
    %492 = vmatprep.subr.mxu0 0.0
    %493 = vmatpush1.msra.mxu0 0.0
    %494 = vmatprep.subr.mxu0 0.0
    %495 = vmatpush1.msra.mxu0 0.0
    %496 = vmatprep.subr.mxu0 0.0
    %497 = vmatpush1.msra.mxu0 0.0
    %498 = vmatprep.subr.mxu0 0.0
    %499 = vmatpush1.msra.mxu0 0.0
    %500 = vmatprep.subr.mxu0 0.0
    %501 = vmatpush1.msra.mxu0 0.0
    %502 = vmatprep.mubr.f32.mxu0 0.0
    %503 = vmatmul.mubr.f32.gmra.mrb[0].mxu0 %v436
    %v504 = vpop.f32.mrb[0].mxu0
    %v505 = vadd.f32 0.0, %v504
    %v506 = vpop.f32.mrb[0].mxu0
    %507 = vdwg.mxu0
    %v508 = vadd.f32 %v435, %v505
    %v509 = vxor.u32 %v508, 2147483648
    %v510 = vmul.f32 %v509, 1.442695
    %v511 = vpow.pop %v510
    %v512 = vadd.f32 %v511, 1.0
    %v513 = vrcp.pop %v512
    %v514 = vmul.f32 1.0, %v513
    %516 = vrot.lane.b32.xlu0 %v508, 32
    %v517 = vpop.permute.xlu0 %516
    %v519 = vmul.f32 %v514, %v517
    %521 = vrot.lane.b32.xlu0 %v519, 64
    %v522 = vpop.permute.xlu0 %521
    %v524 = vadd.f32 %v508, %v522
    %v525 = vtanh.pop %v524
    %v526 = vsub.f32 1.0, %v514
    %528 = vrot.lane.b32.xlu0 %v525, 96
    %v529 = vpop.permute.xlu0 %528
    %v531 = vmul.f32 %v526, %v529
    %v532 = vmul.f32 %v514, %v388
    %v533 = vadd.f32 %v531, %v532
    %v534 = vmul.f32 %v533, %v390
    %536 = vrot.lane.b32.xlu0 %v534, 96
    %v537 = vpop.permute.xlu0 %536
    %v539 = vsel %vm127, %v537, 0.0
    %540 = vadd.xlane.f32.xlu0 %v539
    %v541 = vpop.xlane.xlu0 %540
    %v542 = vadd.f32 %v281, %v541
    %v543 = vtanh.pop %v542
    %v544 = vmul.f32 %v543, 1.442695
    %v545 = vpow.pop %v544
    %v546 = vsel %vm404, %v545, 0.0
    %547 = vadd.xlane.f32.xlu0 %v546
    %v548 = vpop.xlane.xlu0 %547
    %v549 = vadd.f32 %v548, 1e-06
    %v550 = vrcp.pop %v549
    %v551 = vmul.f32 %v545, %v550
    %553 = vset.pattern.permute.xlu0 0
    %554 = vperm.xlu0 %553, %v551
    %v555 = vpop.permute.xlu0 %554
    %v557 = vmul.f32 %v555, %v35
    %558 = vset.pattern.permute.xlu0 1
    %559 = vperm.xlu0 %558, %v551
    %v560 = vpop.permute.xlu0 %559
    %v562 = vmul.f32 %v560, %v36
    %v563 = vadd.f32 %v557, %v562
    %565 = vrot.lane.b32.xlu0 %v533, 96
    %v566 = vpop.permute.xlu0 %565
    %569 = vrot.lane.b32.xlu0 %v563, 32
    %v570 = vpop.permute.xlu0 %569
    %v572 = vsel %vm127, %v566, %v570
    %s573 = scalar_lea.vmem [#allocation3], 8
    %574 = vst.msk [vmem:[%s573] sm:$0xff] %vm432, %v572
    %s575 = scalar_lea.vmem [#allocation2], 16
    %v576 = vld [vmem:[%s575] sm:$0xff]
    %v577 = vsel %vm127, %v566, 0
    %579 = vmatprep.subr.mxu0 0.0
    %580 = vmatpush1.msra.mxu0 %v282
    %581 = vmatprep.subr.mxu0 0.0
    %582 = vmatpush1.msra.mxu0 %v283
    %583 = vmatprep.subr.mxu0 0.0
    %584 = vmatpush1.msra.mxu0 %v284
    %585 = vmatprep.subr.mxu0 0.0
    %586 = vmatpush1.msra.mxu0 %v285
    %587 = vmatprep.subr.mxu0 0.0
    %588 = vmatpush1.msra.mxu0 0.0
    %589 = vmatprep.subr.mxu0 0.0
    %590 = vmatpush1.msra.mxu0 0.0
    %591 = vmatprep.subr.mxu0 0.0
    %592 = vmatpush1.msra.mxu0 0.0
    %593 = vmatprep.subr.mxu0 0.0
    %594 = vmatpush1.msra.mxu0 0.0
    %595 = vmatprep.subr.mxu0 0.0
    %596 = vmatpush1.msra.mxu0 0.0
    %597 = vmatprep.subr.mxu0 0.0
    %598 = vmatpush1.msra.mxu0 0.0
    %599 = vmatprep.subr.mxu0 0.0
    %600 = vmatpush1.msra.mxu0 0.0
    %601 = vmatprep.subr.mxu0 0.0
    %602 = vmatpush1.msra.mxu0 0.0
    %603 = vmatprep.subr.mxu0 0.0
    %604 = vmatpush1.msra.mxu0 0.0
    %605 = vmatprep.subr.mxu0 0.0
    %606 = vmatpush1.msra.mxu0 0.0
    %607 = vmatprep.subr.mxu0 0.0
    %608 = vmatpush1.msra.mxu0 0.0
    %609 = vmatprep.subr.mxu0 0.0
    %610 = vmatpush1.msra.mxu0 0.0
    %611 = vmatprep.subr.mxu0 0.0
    %612 = vmatpush1.msra.mxu0 0.0
    %613 = vmatprep.subr.mxu0 0.0
    %614 = vmatpush1.msra.mxu0 0.0
    %615 = vmatprep.subr.mxu0 0.0
    %616 = vmatpush1.msra.mxu0 0.0
    %617 = vmatprep.subr.mxu0 0.0
    %618 = vmatpush1.msra.mxu0 0.0
    %619 = vmatprep.subr.mxu0 0.0
    %620 = vmatpush1.msra.mxu0 0.0
    %621 = vmatprep.subr.mxu0 0.0
    %622 = vmatpush1.msra.mxu0 0.0
    %623 = vmatprep.subr.mxu0 0.0
    %624 = vmatpush1.msra.mxu0 0.0
    %625 = vmatprep.subr.mxu0 0.0
    %626 = vmatpush1.msra.mxu0 0.0
    %627 = vmatprep.subr.mxu0 0.0
    %628 = vmatpush1.msra.mxu0 0.0
    %629 = vmatprep.subr.mxu0 0.0
    %630 = vmatpush1.msra.mxu0 0.0
    %631 = vmatprep.subr.mxu0 0.0
    %632 = vmatpush1.msra.mxu0 0.0
    %633 = vmatprep.subr.mxu0 0.0
    %634 = vmatpush1.msra.mxu0 0.0
    %635 = vmatprep.subr.mxu0 0.0
    %636 = vmatpush1.msra.mxu0 0.0
    %637 = vmatprep.subr.mxu0 0.0
    %638 = vmatpush1.msra.mxu0 0.0
    %639 = vmatprep.subr.mxu0 0.0
    %640 = vmatpush1.msra.mxu0 0.0
    %641 = vmatprep.subr.mxu0 0.0
    %642 = vmatpush1.msra.mxu0 0.0
    %643 = vmatprep.mubr.f32.mxu0 0.0
    %644 = vmatmul.mubr.f32.gmra.mrb[0].mxu0 %v577
    %v645 = vpop.f32.mrb[0].mxu0
    %v646 = vadd.f32 0.0, %v645
    %v647 = vpop.f32.mrb[0].mxu0
    %648 = vdwg.mxu0
    %v649 = vadd.f32 %v576, %v646
    %v650 = vxor.u32 %v649, 2147483648
    %v651 = vmul.f32 %v650, 1.442695
    %v652 = vpow.pop %v651
    %v653 = vadd.f32 %v652, 1.0
    %v654 = vrcp.pop %v653
    %v655 = vmul.f32 1.0, %v654
    %657 = vrot.lane.b32.xlu0 %v649, 32
    %v658 = vpop.permute.xlu0 %657
    %v660 = vmul.f32 %v655, %v658
    %662 = vrot.lane.b32.xlu0 %v660, 64
    %v663 = vpop.permute.xlu0 %662
    %v665 = vadd.f32 %v649, %v663
    %v666 = vtanh.pop %v665
    %v667 = vsub.f32 1.0, %v655
    %669 = vrot.lane.b32.xlu0 %v666, 96
    %v670 = vpop.permute.xlu0 %669
    %v672 = vmul.f32 %v667, %v670
    %v673 = vmul.f32 %v655, %v533
    %v674 = vadd.f32 %v672, %v673
    %v675 = vmul.f32 %v674, %v390
    %677 = vrot.lane.b32.xlu0 %v675, 96
    %v678 = vpop.permute.xlu0 %677
    %v680 = vsel %vm127, %v678, 0.0
    %681 = vadd.xlane.f32.xlu0 %v680
    %v682 = vpop.xlane.xlu0 %681
    %v683 = vadd.f32 %v281, %v682
    %v684 = vtanh.pop %v683
    %v685 = vmul.f32 %v684, 1.442695
    %v686 = vpow.pop %v685
    %v687 = vsel %vm404, %v686, 0.0
    %688 = vadd.xlane.f32.xlu0 %v687
    %v689 = vpop.xlane.xlu0 %688
    %v690 = vadd.f32 %v689, 1e-06
    %v691 = vrcp.pop %v690
    %v692 = vmul.f32 %v686, %v691
    %694 = vset.pattern.permute.xlu0 0
    %695 = vperm.xlu0 %694, %v692
    %v696 = vpop.permute.xlu0 %695
    %v698 = vmul.f32 %v696, %v35
    %699 = vset.pattern.permute.xlu0 1
    %700 = vperm.xlu0 %699, %v692
    %v701 = vpop.permute.xlu0 %700
    %v703 = vmul.f32 %v701, %v36
    %v704 = vadd.f32 %v698, %v703
    %706 = vrot.lane.b32.xlu0 %v674, 96
    %v707 = vpop.permute.xlu0 %706
    %710 = vrot.lane.b32.xlu0 %v704, 32
    %v711 = vpop.permute.xlu0 %710
    %v713 = vsel %vm127, %v707, %v711
    %s714 = scalar_lea.vmem [#allocation3], 16
    %715 = vst.msk [vmem:[%s714] sm:$0xff] %vm432, %v713
    %s716 = scalar_lea.vmem [#allocation2], 24
    %v717 = vld [vmem:[%s716] sm:$0xff]
    %v718 = vsel %vm127, %v707, 0
    %720 = vmatprep.subr.mxu0 0.0
    %721 = vmatpush1.msra.mxu0 %v282
    %722 = vmatprep.subr.mxu0 0.0
    %723 = vmatpush1.msra.mxu0 %v283
    %724 = vmatprep.subr.mxu0 0.0
    %725 = vmatpush1.msra.mxu0 %v284
    %726 = vmatprep.subr.mxu0 0.0
    %727 = vmatpush1.msra.mxu0 %v285
    %728 = vmatprep.subr.mxu0 0.0
    %729 = vmatpush1.msra.mxu0 0.0
    %730 = vmatprep.subr.mxu0 0.0
    %731 = vmatpush1.msra.mxu0 0.0
    %732 = vmatprep.subr.mxu0 0.0
    %733 = vmatpush1.msra.mxu0 0.0
    %734 = vmatprep.subr.mxu0 0.0
    %735 = vmatpush1.msra.mxu0 0.0
    %736 = vmatprep.subr.mxu0 0.0
    %737 = vmatpush1.msra.mxu0 0.0
    %738 = vmatprep.subr.mxu0 0.0
    %739 = vmatpush1.msra.mxu0 0.0
    %740 = vmatprep.subr.mxu0 0.0
    %741 = vmatpush1.msra.mxu0 0.0
    %742 = vmatprep.subr.mxu0 0.0
    %743 = vmatpush1.msra.mxu0 0.0
    %744 = vmatprep.subr.mxu0 0.0
    %745 = vmatpush1.msra.mxu0 0.0
    %746 = vmatprep.subr.mxu0 0.0
    %747 = vmatpush1.msra.mxu0 0.0
    %748 = vmatprep.subr.mxu0 0.0
    %749 = vmatpush1.msra.mxu0 0.0
    %750 = vmatprep.subr.mxu0 0.0
    %751 = vmatpush1.msra.mxu0 0.0
    %752 = vmatprep.subr.mxu0 0.0
    %753 = vmatpush1.msra.mxu0 0.0
    %754 = vmatprep.subr.mxu0 0.0
    %755 = vmatpush1.msra.mxu0 0.0
    %756 = vmatprep.subr.mxu0 0.0
    %757 = vmatpush1.msra.mxu0 0.0
    %758 = vmatprep.subr.mxu0 0.0
    %759 = vmatpush1.msra.mxu0 0.0
    %760 = vmatprep.subr.mxu0 0.0
    %761 = vmatpush1.msra.mxu0 0.0
    %762 = vmatprep.subr.mxu0 0.0
    %763 = vmatpush1.msra.mxu0 0.0
    %764 = vmatprep.subr.mxu0 0.0
    %765 = vmatpush1.msra.mxu0 0.0
    %766 = vmatprep.subr.mxu0 0.0
    %767 = vmatpush1.msra.mxu0 0.0
    %768 = vmatprep.subr.mxu0 0.0
    %769 = vmatpush1.msra.mxu0 0.0
    %770 = vmatprep.subr.mxu0 0.0
    %771 = vmatpush1.msra.mxu0 0.0
    %772 = vmatprep.subr.mxu0 0.0
    %773 = vmatpush1.msra.mxu0 0.0
    %774 = vmatprep.subr.mxu0 0.0
    %775 = vmatpush1.msra.mxu0 0.0
    %776 = vmatprep.subr.mxu0 0.0
    %777 = vmatpush1.msra.mxu0 0.0
    %778 = vmatprep.subr.mxu0 0.0
    %779 = vmatpush1.msra.mxu0 0.0
    %780 = vmatprep.subr.mxu0 0.0
    %781 = vmatpush1.msra.mxu0 0.0
    %782 = vmatprep.subr.mxu0 0.0
    %783 = vmatpush1.msra.mxu0 0.0
    %784 = vmatprep.mubr.f32.mxu0 0.0
    %785 = vmatmul.mubr.f32.gmra.mrb[0].mxu0 %v718
    %v786 = vpop.f32.mrb[0].mxu0
    %v787 = vadd.f32 0.0, %v786
    %v788 = vpop.f32.mrb[0].mxu0
    %789 = vdwg.mxu0
    %v790 = vadd.f32 %v717, %v787
    %v791 = vxor.u32 %v790, 2147483648
    %v792 = vmul.f32 %v791, 1.442695
    %v793 = vpow.pop %v792
    %v794 = vadd.f32 %v793, 1.0
    %v795 = vrcp.pop %v794
    %v796 = vmul.f32 1.0, %v795
    %798 = vrot.lane.b32.xlu0 %v790, 32
    %v799 = vpop.permute.xlu0 %798
    %v801 = vmul.f32 %v796, %v799
    %803 = vrot.lane.b32.xlu0 %v801, 64
    %v804 = vpop.permute.xlu0 %803
    %v806 = vadd.f32 %v790, %v804
    %v807 = vtanh.pop %v806
    %v808 = vsub.f32 1.0, %v796
    %810 = vrot.lane.b32.xlu0 %v807, 96
    %v811 = vpop.permute.xlu0 %810
    %v813 = vmul.f32 %v808, %v811
    %v814 = vmul.f32 %v796, %v674
    %v815 = vadd.f32 %v813, %v814
    %v816 = vmul.f32 %v815, %v390
    %818 = vrot.lane.b32.xlu0 %v816, 96
    %v819 = vpop.permute.xlu0 %818
    %v821 = vsel %vm127, %v819, 0.0
    %822 = vadd.xlane.f32.xlu0 %v821
    %v823 = vpop.xlane.xlu0 %822
    %v824 = vadd.f32 %v281, %v823
    %v825 = vtanh.pop %v824
    %v826 = vmul.f32 %v825, 1.442695
    %v827 = vpow.pop %v826
    %v828 = vsel %vm404, %v827, 0.0
    %829 = vadd.xlane.f32.xlu0 %v828
    %v830 = vpop.xlane.xlu0 %829
    %v831 = vadd.f32 %v830, 1e-06
    %v832 = vrcp.pop %v831
    %v833 = vmul.f32 %v827, %v832
    %835 = vset.pattern.permute.xlu0 0
    %836 = vperm.xlu0 %835, %v833
    %v837 = vpop.permute.xlu0 %836
    %v839 = vmul.f32 %v837, %v35
    %840 = vset.pattern.permute.xlu0 1
    %841 = vperm.xlu0 %840, %v833
    %v842 = vpop.permute.xlu0 %841
    %v844 = vmul.f32 %v842, %v36
    %v845 = vadd.f32 %v839, %v844
    %847 = vrot.lane.b32.xlu0 %v815, 96
    %v848 = vpop.permute.xlu0 %847
    %851 = vrot.lane.b32.xlu0 %v845, 32
    %v852 = vpop.permute.xlu0 %851
    %v854 = vsel %vm127, %v848, %v852
    %s855 = scalar_lea.vmem [#allocation3], 24
    %856 = vst.msk [vmem:[%s855] sm:$0xff] %vm432, %v854
    %s857 = scalar_lea.vmem [#allocation2], 32
    %v858 = vld [vmem:[%s857] sm:$0xff]
    %v859 = vsel %vm127, %v848, 0
    %861 = vmatprep.subr.mxu0 0.0
    %862 = vmatpush1.msra.mxu0 %v282
    %863 = vmatprep.subr.mxu0 0.0
    %864 = vmatpush1.msra.mxu0 %v283
    %865 = vmatprep.subr.mxu0 0.0
    %866 = vmatpush1.msra.mxu0 %v284
    %867 = vmatprep.subr.mxu0 0.0
    %868 = vmatpush1.msra.mxu0 %v285
    %869 = vmatprep.subr.mxu0 0.0
    %870 = vmatpush1.msra.mxu0 0.0
    %871 = vmatprep.subr.mxu0 0.0
    %872 = vmatpush1.msra.mxu0 0.0
    %873 = vmatprep.subr.mxu0 0.0
    %874 = vmatpush1.msra.mxu0 0.0
    %875 = vmatprep.subr.mxu0 0.0
    %876 = vmatpush1.msra.mxu0 0.0
    %877 = vmatprep.subr.mxu0 0.0
    %878 = vmatpush1.msra.mxu0 0.0
    %879 = vmatprep.subr.mxu0 0.0
    %880 = vmatpush1.msra.mxu0 0.0
    %881 = vmatprep.subr.mxu0 0.0
    %882 = vmatpush1.msra.mxu0 0.0
    %883 = vmatprep.subr.mxu0 0.0
    %884 = vmatpush1.msra.mxu0 0.0
    %885 = vmatprep.subr.mxu0 0.0
    %886 = vmatpush1.msra.mxu0 0.0
    %887 = vmatprep.subr.mxu0 0.0
    %888 = vmatpush1.msra.mxu0 0.0
    %889 = vmatprep.subr.mxu0 0.0
    %890 = vmatpush1.msra.mxu0 0.0
    %891 = vmatprep.subr.mxu0 0.0
    %892 = vmatpush1.msra.mxu0 0.0
    %893 = vmatprep.subr.mxu0 0.0
    %894 = vmatpush1.msra.mxu0 0.0
    %895 = vmatprep.subr.mxu0 0.0
    %896 = vmatpush1.msra.mxu0 0.0
    %897 = vmatprep.subr.mxu0 0.0
    %898 = vmatpush1.msra.mxu0 0.0
    %899 = vmatprep.subr.mxu0 0.0
    %900 = vmatpush1.msra.mxu0 0.0
    %901 = vmatprep.subr.mxu0 0.0
    %902 = vmatpush1.msra.mxu0 0.0
    %903 = vmatprep.subr.mxu0 0.0
    %904 = vmatpush1.msra.mxu0 0.0
    %905 = vmatprep.subr.mxu0 0.0
    %906 = vmatpush1.msra.mxu0 0.0
    %907 = vmatprep.subr.mxu0 0.0
    %908 = vmatpush1.msra.mxu0 0.0
    %909 = vmatprep.subr.mxu0 0.0
    %910 = vmatpush1.msra.mxu0 0.0
    %911 = vmatprep.subr.mxu0 0.0
    %912 = vmatpush1.msra.mxu0 0.0
    %913 = vmatprep.subr.mxu0 0.0
    %914 = vmatpush1.msra.mxu0 0.0
    %915 = vmatprep.subr.mxu0 0.0
    %916 = vmatpush1.msra.mxu0 0.0
    %917 = vmatprep.subr.mxu0 0.0
    %918 = vmatpush1.msra.mxu0 0.0
    %919 = vmatprep.subr.mxu0 0.0
    %920 = vmatpush1.msra.mxu0 0.0
    %921 = vmatprep.subr.mxu0 0.0
    %922 = vmatpush1.msra.mxu0 0.0
    %923 = vmatprep.subr.mxu0 0.0
    %924 = vmatpush1.msra.mxu0 0.0
    %925 = vmatprep.mubr.f32.mxu0 0.0
    %926 = vmatmul.mubr.f32.gmra.mrb[0].mxu0 %v859
    %v927 = vpop.f32.mrb[0].mxu0
    %v928 = vadd.f32 0.0, %v927
    %v929 = vpop.f32.mrb[0].mxu0
    %930 = vdwg.mxu0
    %v931 = vadd.f32 %v858, %v928
    %v932 = vxor.u32 %v931, 2147483648
    %v933 = vmul.f32 %v932, 1.442695
    %v934 = vpow.pop %v933
    %v935 = vadd.f32 %v934, 1.0
    %v936 = vrcp.pop %v935
    %v937 = vmul.f32 1.0, %v936
    %939 = vrot.lane.b32.xlu0 %v931, 32
    %v940 = vpop.permute.xlu0 %939
    %v942 = vmul.f32 %v937, %v940
    %944 = vrot.lane.b32.xlu0 %v942, 64
    %v945 = vpop.permute.xlu0 %944
    %v947 = vadd.f32 %v931, %v945
    %v948 = vtanh.pop %v947
    %v949 = vsub.f32 1.0, %v937
    %951 = vrot.lane.b32.xlu0 %v948, 96
    %v952 = vpop.permute.xlu0 %951
    %v954 = vmul.f32 %v949, %v952
    %v955 = vmul.f32 %v937, %v815
    %v956 = vadd.f32 %v954, %v955
    %v957 = vmul.f32 %v956, %v390
    %959 = vrot.lane.b32.xlu0 %v957, 96
    %v960 = vpop.permute.xlu0 %959
    %v962 = vsel %vm127, %v960, 0.0
    %963 = vadd.xlane.f32.xlu0 %v962
    %v964 = vpop.xlane.xlu0 %963
    %v965 = vadd.f32 %v281, %v964
    %v966 = vtanh.pop %v965
    %v967 = vmul.f32 %v966, 1.442695
    %v968 = vpow.pop %v967
    %v969 = vsel %vm404, %v968, 0.0
    %970 = vadd.xlane.f32.xlu0 %v969
    %v971 = vpop.xlane.xlu0 %970
    %v972 = vadd.f32 %v971, 1e-06
    %v973 = vrcp.pop %v972
    %v974 = vmul.f32 %v968, %v973
    %976 = vset.pattern.permute.xlu0 0
    %977 = vperm.xlu0 %976, %v974
    %v978 = vpop.permute.xlu0 %977
    %v980 = vmul.f32 %v978, %v35
    %981 = vset.pattern.permute.xlu0 1
    %982 = vperm.xlu0 %981, %v974
    %v983 = vpop.permute.xlu0 %982
    %v985 = vmul.f32 %v983, %v36
    %v986 = vadd.f32 %v980, %v985
    %988 = vrot.lane.b32.xlu0 %v956, 96
    %v989 = vpop.permute.xlu0 %988
    %992 = vrot.lane.b32.xlu0 %v986, 32
    %v993 = vpop.permute.xlu0 %992
    %v995 = vsel %vm127, %v989, %v993
    %s996 = scalar_lea.vmem [#allocation3], 32
    %997 = vst.msk [vmem:[%s996] sm:$0xff] %vm432, %v995
    %s998 = scalar_lea.vmem [#allocation2], 40
    %v999 = vld [vmem:[%s998] sm:$0xff]
    %v1000 = vsel %vm127, %v989, 0
    %1002 = vmatprep.subr.mxu0 0.0
    %1003 = vmatpush1.msra.mxu0 %v282
    %1004 = vmatprep.subr.mxu0 0.0
    %1005 = vmatpush1.msra.mxu0 %v283
    %1006 = vmatprep.subr.mxu0 0.0
    %1007 = vmatpush1.msra.mxu0 %v284
    %1008 = vmatprep.subr.mxu0 0.0
    %1009 = vmatpush1.msra.mxu0 %v285
    %1010 = vmatprep.subr.mxu0 0.0
    %1011 = vmatpush1.msra.mxu0 0.0
    %1012 = vmatprep.subr.mxu0 0.0
    %1013 = vmatpush1.msra.mxu0 0.0
    %1014 = vmatprep.subr.mxu0 0.0
    %1015 = vmatpush1.msra.mxu0 0.0
    %1016 = vmatprep.subr.mxu0 0.0
    %1017 = vmatpush1.msra.mxu0 0.0
    %1018 = vmatprep.subr.mxu0 0.0
    %1019 = vmatpush1.msra.mxu0 0.0
    %1020 = vmatprep.subr.mxu0 0.0
    %1021 = vmatpush1.msra.mxu0 0.0
    %1022 = vmatprep.subr.mxu0 0.0
    %1023 = vmatpush1.msra.mxu0 0.0
    %1024 = vmatprep.subr.mxu0 0.0
    %1025 = vmatpush1.msra.mxu0 0.0
    %1026 = vmatprep.subr.mxu0 0.0
    %1027 = vmatpush1.msra.mxu0 0.0
    %1028 = vmatprep.subr.mxu0 0.0
    %1029 = vmatpush1.msra.mxu0 0.0
    %1030 = vmatprep.subr.mxu0 0.0
    %1031 = vmatpush1.msra.mxu0 0.0
    %1032 = vmatprep.subr.mxu0 0.0
    %1033 = vmatpush1.msra.mxu0 0.0
    %1034 = vmatprep.subr.mxu0 0.0
    %1035 = vmatpush1.msra.mxu0 0.0
    %1036 = vmatprep.subr.mxu0 0.0
    %1037 = vmatpush1.msra.mxu0 0.0
    %1038 = vmatprep.subr.mxu0 0.0
    %1039 = vmatpush1.msra.mxu0 0.0
    %1040 = vmatprep.subr.mxu0 0.0
    %1041 = vmatpush1.msra.mxu0 0.0
    %1042 = vmatprep.subr.mxu0 0.0
    %1043 = vmatpush1.msra.mxu0 0.0
    %1044 = vmatprep.subr.mxu0 0.0
    %1045 = vmatpush1.msra.mxu0 0.0
    %1046 = vmatprep.subr.mxu0 0.0
    %1047 = vmatpush1.msra.mxu0 0.0
    %1048 = vmatprep.subr.mxu0 0.0
    %1049 = vmatpush1.msra.mxu0 0.0
    %1050 = vmatprep.subr.mxu0 0.0
    %1051 = vmatpush1.msra.mxu0 0.0
    %1052 = vmatprep.subr.mxu0 0.0
    %1053 = vmatpush1.msra.mxu0 0.0
    %1054 = vmatprep.subr.mxu0 0.0
    %1055 = vmatpush1.msra.mxu0 0.0
    %1056 = vmatprep.subr.mxu0 0.0
    %1057 = vmatpush1.msra.mxu0 0.0
    %1058 = vmatprep.subr.mxu0 0.0
    %1059 = vmatpush1.msra.mxu0 0.0
    %1060 = vmatprep.subr.mxu0 0.0
    %1061 = vmatpush1.msra.mxu0 0.0
    %1062 = vmatprep.subr.mxu0 0.0
    %1063 = vmatpush1.msra.mxu0 0.0
    %1064 = vmatprep.subr.mxu0 0.0
    %1065 = vmatpush1.msra.mxu0 0.0
    %1066 = vmatprep.mubr.f32.mxu0 0.0
    %1067 = vmatmul.mubr.f32.gmra.mrb[0].mxu0 %v1000
    %v1068 = vpop.f32.mrb[0].mxu0
    %v1069 = vadd.f32 0.0, %v1068
    %v1070 = vpop.f32.mrb[0].mxu0
    %1071 = vdwg.mxu0
    %v1072 = vadd.f32 %v999, %v1069
    %v1073 = vxor.u32 %v1072, 2147483648
    %v1074 = vmul.f32 %v1073, 1.442695
    %v1075 = vpow.pop %v1074
    %v1076 = vadd.f32 %v1075, 1.0
    %v1077 = vrcp.pop %v1076
    %v1078 = vmul.f32 1.0, %v1077
    %1080 = vrot.lane.b32.xlu0 %v1072, 32
    %v1081 = vpop.permute.xlu0 %1080
    %v1083 = vmul.f32 %v1078, %v1081
    %1085 = vrot.lane.b32.xlu0 %v1083, 64
    %v1086 = vpop.permute.xlu0 %1085
    %v1088 = vadd.f32 %v1072, %v1086
    %v1089 = vtanh.pop %v1088
    %v1090 = vsub.f32 1.0, %v1078
    %1092 = vrot.lane.b32.xlu0 %v1089, 96
    %v1093 = vpop.permute.xlu0 %1092
    %v1095 = vmul.f32 %v1090, %v1093
    %v1096 = vmul.f32 %v1078, %v956
    %v1097 = vadd.f32 %v1095, %v1096
    %v1098 = vmul.f32 %v1097, %v390
    %1100 = vrot.lane.b32.xlu0 %v1098, 96
    %v1101 = vpop.permute.xlu0 %1100
    %v1103 = vsel %vm127, %v1101, 0.0
    %1104 = vadd.xlane.f32.xlu0 %v1103
    %v1105 = vpop.xlane.xlu0 %1104
    %v1106 = vadd.f32 %v281, %v1105
    %v1107 = vtanh.pop %v1106
    %v1108 = vmul.f32 %v1107, 1.442695
    %v1109 = vpow.pop %v1108
    %v1110 = vsel %vm404, %v1109, 0.0
    %1111 = vadd.xlane.f32.xlu0 %v1110
    %v1112 = vpop.xlane.xlu0 %1111
    %v1113 = vadd.f32 %v1112, 1e-06
    %v1114 = vrcp.pop %v1113
    %v1115 = vmul.f32 %v1109, %v1114
    %1117 = vset.pattern.permute.xlu0 0
    %1118 = vperm.xlu0 %1117, %v1115
    %v1119 = vpop.permute.xlu0 %1118
    %v1121 = vmul.f32 %v1119, %v35
    %1122 = vset.pattern.permute.xlu0 1
    %1123 = vperm.xlu0 %1122, %v1115
    %v1124 = vpop.permute.xlu0 %1123
    %v1126 = vmul.f32 %v1124, %v36
    %v1127 = vadd.f32 %v1121, %v1126
    %1129 = vrot.lane.b32.xlu0 %v1097, 96
    %v1130 = vpop.permute.xlu0 %1129
    %1133 = vrot.lane.b32.xlu0 %v1127, 32
    %v1134 = vpop.permute.xlu0 %1133
    %v1136 = vsel %vm127, %v1130, %v1134
    %s1137 = scalar_lea.vmem [#allocation3], 40
    %1138 = vst.msk [vmem:[%s1137] sm:$0xff] %vm432, %v1136
    %s1139 = scalar_lea.vmem [#allocation2], 48
    %v1140 = vld [vmem:[%s1139] sm:$0xff]
    %v1141 = vsel %vm127, %v1130, 0
    %1143 = vmatprep.subr.mxu0 0.0
    %1144 = vmatpush1.msra.mxu0 %v282
    %1145 = vmatprep.subr.mxu0 0.0
    %1146 = vmatpush1.msra.mxu0 %v283
    %1147 = vmatprep.subr.mxu0 0.0
    %1148 = vmatpush1.msra.mxu0 %v284
    %1149 = vmatprep.subr.mxu0 0.0
    %1150 = vmatpush1.msra.mxu0 %v285
    %1151 = vmatprep.subr.mxu0 0.0
    %1152 = vmatpush1.msra.mxu0 0.0
    %1153 = vmatprep.subr.mxu0 0.0
    %1154 = vmatpush1.msra.mxu0 0.0
    %1155 = vmatprep.subr.mxu0 0.0
    %1156 = vmatpush1.msra.mxu0 0.0
    %1157 = vmatprep.subr.mxu0 0.0
    %1158 = vmatpush1.msra.mxu0 0.0
    %1159 = vmatprep.subr.mxu0 0.0
    %1160 = vmatpush1.msra.mxu0 0.0
    %1161 = vmatprep.subr.mxu0 0.0
    %1162 = vmatpush1.msra.mxu0 0.0
    %1163 = vmatprep.subr.mxu0 0.0
    %1164 = vmatpush1.msra.mxu0 0.0
    %1165 = vmatprep.subr.mxu0 0.0
    %1166 = vmatpush1.msra.mxu0 0.0
    %1167 = vmatprep.subr.mxu0 0.0
    %1168 = vmatpush1.msra.mxu0 0.0
    %1169 = vmatprep.subr.mxu0 0.0
    %1170 = vmatpush1.msra.mxu0 0.0
    %1171 = vmatprep.subr.mxu0 0.0
    %1172 = vmatpush1.msra.mxu0 0.0
    %1173 = vmatprep.subr.mxu0 0.0
    %1174 = vmatpush1.msra.mxu0 0.0
    %1175 = vmatprep.subr.mxu0 0.0
    %1176 = vmatpush1.msra.mxu0 0.0
    %1177 = vmatprep.subr.mxu0 0.0
    %1178 = vmatpush1.msra.mxu0 0.0
    %1179 = vmatprep.subr.mxu0 0.0
    %1180 = vmatpush1.msra.mxu0 0.0
    %1181 = vmatprep.subr.mxu0 0.0
    %1182 = vmatpush1.msra.mxu0 0.0
    %1183 = vmatprep.subr.mxu0 0.0
    %1184 = vmatpush1.msra.mxu0 0.0
    %1185 = vmatprep.subr.mxu0 0.0
    %1186 = vmatpush1.msra.mxu0 0.0
    %1187 = vmatprep.subr.mxu0 0.0
    %1188 = vmatpush1.msra.mxu0 0.0
    %1189 = vmatprep.subr.mxu0 0.0
    %1190 = vmatpush1.msra.mxu0 0.0
    %1191 = vmatprep.subr.mxu0 0.0
    %1192 = vmatpush1.msra.mxu0 0.0
    %1193 = vmatprep.subr.mxu0 0.0
    %1194 = vmatpush1.msra.mxu0 0.0
    %1195 = vmatprep.subr.mxu0 0.0
    %1196 = vmatpush1.msra.mxu0 0.0
    %1197 = vmatprep.subr.mxu0 0.0
    %1198 = vmatpush1.msra.mxu0 0.0
    %1199 = vmatprep.subr.mxu0 0.0
    %1200 = vmatpush1.msra.mxu0 0.0
    %1201 = vmatprep.subr.mxu0 0.0
    %1202 = vmatpush1.msra.mxu0 0.0
    %1203 = vmatprep.subr.mxu0 0.0
    %1204 = vmatpush1.msra.mxu0 0.0
    %1205 = vmatprep.subr.mxu0 0.0
    %1206 = vmatpush1.msra.mxu0 0.0
    %1207 = vmatprep.mubr.f32.mxu0 0.0
    %1208 = vmatmul.mubr.f32.gmra.mrb[0].mxu0 %v1141
    %v1209 = vpop.f32.mrb[0].mxu0
    %v1210 = vadd.f32 0.0, %v1209
    %v1211 = vpop.f32.mrb[0].mxu0
    %1212 = vdwg.mxu0
    %v1213 = vadd.f32 %v1140, %v1210
    %v1214 = vxor.u32 %v1213, 2147483648
    %v1215 = vmul.f32 %v1214, 1.442695
    %v1216 = vpow.pop %v1215
    %v1217 = vadd.f32 %v1216, 1.0
    %v1218 = vrcp.pop %v1217
    %v1219 = vmul.f32 1.0, %v1218
    %1221 = vrot.lane.b32.xlu0 %v1213, 32
    %v1222 = vpop.permute.xlu0 %1221
    %v1224 = vmul.f32 %v1219, %v1222
    %1226 = vrot.lane.b32.xlu0 %v1224, 64
    %v1227 = vpop.permute.xlu0 %1226
    %v1229 = vadd.f32 %v1213, %v1227
    %v1230 = vtanh.pop %v1229
    %v1231 = vsub.f32 1.0, %v1219
    %1233 = vrot.lane.b32.xlu0 %v1230, 96
    %v1234 = vpop.permute.xlu0 %1233
    %v1236 = vmul.f32 %v1231, %v1234
    %v1237 = vmul.f32 %v1219, %v1097
    %v1238 = vadd.f32 %v1236, %v1237
    %v1239 = vmul.f32 %v1238, %v390
    %1241 = vrot.lane.b32.xlu0 %v1239, 96
    %v1242 = vpop.permute.xlu0 %1241
    %v1244 = vsel %vm127, %v1242, 0.0
    %1245 = vadd.xlane.f32.xlu0 %v1244
    %v1246 = vpop.xlane.xlu0 %1245
    %v1247 = vadd.f32 %v281, %v1246
    %v1248 = vtanh.pop %v1247
    %v1249 = vmul.f32 %v1248, 1.442695
    %v1250 = vpow.pop %v1249
    %v1251 = vsel %vm404, %v1250, 0.0
    %1252 = vadd.xlane.f32.xlu0 %v1251
    %v1253 = vpop.xlane.xlu0 %1252
    %v1254 = vadd.f32 %v1253, 1e-06
    %v1255 = vrcp.pop %v1254
    %v1256 = vmul.f32 %v1250, %v1255
    %1258 = vset.pattern.permute.xlu0 0
    %1259 = vperm.xlu0 %1258, %v1256
    %v1260 = vpop.permute.xlu0 %1259
    %v1262 = vmul.f32 %v1260, %v35
    %1263 = vset.pattern.permute.xlu0 1
    %1264 = vperm.xlu0 %1263, %v1256
    %v1265 = vpop.permute.xlu0 %1264
    %v1267 = vmul.f32 %v1265, %v36
    %v1268 = vadd.f32 %v1262, %v1267
    %1270 = vrot.lane.b32.xlu0 %v1238, 96
    %v1271 = vpop.permute.xlu0 %1270
    %1274 = vrot.lane.b32.xlu0 %v1268, 32
    %v1275 = vpop.permute.xlu0 %1274
    %v1277 = vsel %vm127, %v1271, %v1275
    %s1278 = scalar_lea.vmem [#allocation3], 48
    %1279 = vst.msk [vmem:[%s1278] sm:$0xff] %vm432, %v1277
    %s1280 = scalar_lea.vmem [#allocation2], 56
    %v1281 = vld [vmem:[%s1280] sm:$0xff]
    %v1282 = vsel %vm127, %v1271, 0
    %1284 = vmatprep.subr.mxu0 0.0
    %1285 = vmatpush1.msra.mxu0 %v282
    %1286 = vmatprep.subr.mxu0 0.0
    %1287 = vmatpush1.msra.mxu0 %v283
    %1288 = vmatprep.subr.mxu0 0.0
    %1289 = vmatpush1.msra.mxu0 %v284
    %1290 = vmatprep.subr.mxu0 0.0
    %1291 = vmatpush1.msra.mxu0 %v285
    %1292 = vmatprep.subr.mxu0 0.0
    %1293 = vmatpush1.msra.mxu0 0.0
    %1294 = vmatprep.subr.mxu0 0.0
    %1295 = vmatpush1.msra.mxu0 0.0
    %1296 = vmatprep.subr.mxu0 0.0
    %1297 = vmatpush1.msra.mxu0 0.0
    %1298 = vmatprep.subr.mxu0 0.0
    %1299 = vmatpush1.msra.mxu0 0.0
    %1300 = vmatprep.subr.mxu0 0.0
    %1301 = vmatpush1.msra.mxu0 0.0
    %1302 = vmatprep.subr.mxu0 0.0
    %1303 = vmatpush1.msra.mxu0 0.0
    %1304 = vmatprep.subr.mxu0 0.0
    %1305 = vmatpush1.msra.mxu0 0.0
    %1306 = vmatprep.subr.mxu0 0.0
    %1307 = vmatpush1.msra.mxu0 0.0
    %1308 = vmatprep.subr.mxu0 0.0
    %1309 = vmatpush1.msra.mxu0 0.0
    %1310 = vmatprep.subr.mxu0 0.0
    %1311 = vmatpush1.msra.mxu0 0.0
    %1312 = vmatprep.subr.mxu0 0.0
    %1313 = vmatpush1.msra.mxu0 0.0
    %1314 = vmatprep.subr.mxu0 0.0
    %1315 = vmatpush1.msra.mxu0 0.0
    %1316 = vmatprep.subr.mxu0 0.0
    %1317 = vmatpush1.msra.mxu0 0.0
    %1318 = vmatprep.subr.mxu0 0.0
    %1319 = vmatpush1.msra.mxu0 0.0
    %1320 = vmatprep.subr.mxu0 0.0
    %1321 = vmatpush1.msra.mxu0 0.0
    %1322 = vmatprep.subr.mxu0 0.0
    %1323 = vmatpush1.msra.mxu0 0.0
    %1324 = vmatprep.subr.mxu0 0.0
    %1325 = vmatpush1.msra.mxu0 0.0
    %1326 = vmatprep.subr.mxu0 0.0
    %1327 = vmatpush1.msra.mxu0 0.0
    %1328 = vmatprep.subr.mxu0 0.0
    %1329 = vmatpush1.msra.mxu0 0.0
    %1330 = vmatprep.subr.mxu0 0.0
    %1331 = vmatpush1.msra.mxu0 0.0
    %1332 = vmatprep.subr.mxu0 0.0
    %1333 = vmatpush1.msra.mxu0 0.0
    %1334 = vmatprep.subr.mxu0 0.0
    %1335 = vmatpush1.msra.mxu0 0.0
    %1336 = vmatprep.subr.mxu0 0.0
    %1337 = vmatpush1.msra.mxu0 0.0
    %1338 = vmatprep.subr.mxu0 0.0
    %1339 = vmatpush1.msra.mxu0 0.0
    %1340 = vmatprep.subr.mxu0 0.0
    %1341 = vmatpush1.msra.mxu0 0.0
    %1342 = vmatprep.subr.mxu0 0.0
    %1343 = vmatpush1.msra.mxu0 0.0
    %1344 = vmatprep.subr.mxu0 0.0
    %1345 = vmatpush1.msra.mxu0 0.0
    %1346 = vmatprep.subr.mxu0 0.0
    %1347 = vmatpush1.msra.mxu0 0.0
    %1348 = vmatprep.mubr.f32.mxu0 0.0
    %1349 = vmatmul.mubr.f32.gmra.mrb[0].mxu0 %v1282
    %v1350 = vpop.f32.mrb[0].mxu0
    %v1351 = vadd.f32 0.0, %v1350
    %v1352 = vpop.f32.mrb[0].mxu0
    %1353 = vdwg.mxu0
    %v1354 = vadd.f32 %v1281, %v1351
    %v1355 = vxor.u32 %v1354, 2147483648
    %v1356 = vmul.f32 %v1355, 1.442695
    %v1357 = vpow.pop %v1356
    %v1358 = vadd.f32 %v1357, 1.0
    %v1359 = vrcp.pop %v1358
    %v1360 = vmul.f32 1.0, %v1359
    %1362 = vrot.lane.b32.xlu0 %v1354, 32
    %v1363 = vpop.permute.xlu0 %1362
    %v1365 = vmul.f32 %v1360, %v1363
    %1367 = vrot.lane.b32.xlu0 %v1365, 64
    %v1368 = vpop.permute.xlu0 %1367
    %v1370 = vadd.f32 %v1354, %v1368
    %v1371 = vtanh.pop %v1370
    %v1372 = vsub.f32 1.0, %v1360
    %1374 = vrot.lane.b32.xlu0 %v1371, 96
    %v1375 = vpop.permute.xlu0 %1374
    %v1377 = vmul.f32 %v1372, %v1375
    %v1378 = vmul.f32 %v1360, %v1238
    %v1379 = vadd.f32 %v1377, %v1378
    %v1380 = vmul.f32 %v1379, %v390
    %1382 = vrot.lane.b32.xlu0 %v1380, 96
    %v1383 = vpop.permute.xlu0 %1382
    %v1385 = vsel %vm127, %v1383, 0.0
    %1386 = vadd.xlane.f32.xlu0 %v1385
    %v1387 = vpop.xlane.xlu0 %1386
    %v1388 = vadd.f32 %v281, %v1387
    %v1389 = vtanh.pop %v1388
    %v1390 = vmul.f32 %v1389, 1.442695
    %v1391 = vpow.pop %v1390
    %v1392 = vsel %vm404, %v1391, 0.0
    %1393 = vadd.xlane.f32.xlu0 %v1392
    %v1394 = vpop.xlane.xlu0 %1393
    %v1395 = vadd.f32 %v1394, 1e-06
    %v1396 = vrcp.pop %v1395
    %v1397 = vmul.f32 %v1391, %v1396
    %1399 = vset.pattern.permute.xlu0 0
    %1400 = vperm.xlu0 %1399, %v1397
    %v1401 = vpop.permute.xlu0 %1400
    %v1403 = vmul.f32 %v1401, %v35
    %1404 = vset.pattern.permute.xlu0 1
    %1405 = vperm.xlu0 %1404, %v1397
    %v1406 = vpop.permute.xlu0 %1405
    %v1408 = vmul.f32 %v1406, %v36
    %v1409 = vadd.f32 %v1403, %v1408
    %1411 = vrot.lane.b32.xlu0 %v1379, 96
    %v1412 = vpop.permute.xlu0 %1411
    %1415 = vrot.lane.b32.xlu0 %v1409, 32
    %v1416 = vpop.permute.xlu0 %1415
    %v1418 = vsel %vm127, %v1412, %v1416
    %s1419 = scalar_lea.vmem [#allocation3], 56
    %1420 = vst.msk [vmem:[%s1419] sm:$0xff] %vm432, %v1418
    %v1421 = vld [vmem:[#allocation3] sm:$0xff]
    %v1422 = vld [vmem:[#allocation3 + $0x8] sm:$0xff]
    %v1423 = vld [vmem:[#allocation3 + $0x10] sm:$0xff]
    %v1424 = vld [vmem:[#allocation3 + $0x18] sm:$0xff]
    %v1425 = vld [vmem:[#allocation3 + $0x20] sm:$0xff]
    %v1426 = vld [vmem:[#allocation3 + $0x28] sm:$0xff]
    %v1427 = vld [vmem:[#allocation3 + $0x30] sm:$0xff]
    %v1428 = vld [vmem:[#allocation3 + $0x38] sm:$0xff]
    %v1429 = vld [vmem:[%s8] sm:$0xff]
    %v1430 = vld [vmem:[%s8 + $0x8] sm:$0xff]
    %v1431 = vld [vmem:[%s8 + $0x10] sm:$0xff]
    %v1432 = vld [vmem:[%s8 + $0x18] sm:$0xff]
    %v1433 = vld [vmem:[%s8 + $0x20] sm:$0xff]
    %v1434 = vld [vmem:[%s8 + $0x28] sm:$0xff]
    %v1436 = vsel %vm432, %v1421, 0
    %v1439 = vsel %vm432, %v1422, 0
    %v1442 = vsel %vm432, %v1423, 0
    %v1445 = vsel %vm432, %v1424, 0
    %v1448 = vsel %vm432, %v1425, 0
    %v1451 = vsel %vm432, %v1426, 0
    %v1454 = vsel %vm432, %v1427, 0
    %v1457 = vsel %vm432, %v1428, 0
    %1459 = vmatprep.subr.mxu0 0.0
    %1460 = vmatpush1.msra.mxu0 %v1429
    %1461 = vmatprep.subr.mxu0 0.0
    %1462 = vmatpush1.msra.mxu0 %v1430
    %1463 = vmatprep.subr.mxu0 0.0
    %1464 = vmatpush1.msra.mxu0 %v1431
    %1465 = vmatprep.subr.mxu0 0.0
    %1466 = vmatpush1.msra.mxu0 %v1432
    %1467 = vmatprep.subr.mxu0 0.0
    %1468 = vmatpush1.msra.mxu0 %v1433
    %1469 = vmatprep.subr.mxu0 0.0
    %1470 = vmatpush1.msra.mxu0 %v1434
    %1471 = vmatprep.subr.mxu0 0.0
    %1472 = vmatpush1.msra.mxu0 0.0
    %1473 = vmatprep.subr.mxu0 0.0
    %1474 = vmatpush1.msra.mxu0 0.0
    %1475 = vmatprep.subr.mxu0 0.0
    %1476 = vmatpush1.msra.mxu0 0.0
    %1477 = vmatprep.subr.mxu0 0.0
    %1478 = vmatpush1.msra.mxu0 0.0
    %1479 = vmatprep.subr.mxu0 0.0
    %1480 = vmatpush1.msra.mxu0 0.0
    %1481 = vmatprep.subr.mxu0 0.0
    %1482 = vmatpush1.msra.mxu0 0.0
    %1483 = vmatprep.subr.mxu0 0.0
    %1484 = vmatpush1.msra.mxu0 0.0
    %1485 = vmatprep.subr.mxu0 0.0
    %1486 = vmatpush1.msra.mxu0 0.0
    %1487 = vmatprep.subr.mxu0 0.0
    %1488 = vmatpush1.msra.mxu0 0.0
    %1489 = vmatprep.subr.mxu0 0.0
    %1490 = vmatpush1.msra.mxu0 0.0
    %1491 = vmatprep.subr.mxu0 0.0
    %1492 = vmatpush1.msra.mxu0 0.0
    %1493 = vmatprep.subr.mxu0 0.0
    %1494 = vmatpush1.msra.mxu0 0.0
    %1495 = vmatprep.subr.mxu0 0.0
    %1496 = vmatpush1.msra.mxu0 0.0
    %1497 = vmatprep.subr.mxu0 0.0
    %1498 = vmatpush1.msra.mxu0 0.0
    %1499 = vmatprep.subr.mxu0 0.0
    %1500 = vmatpush1.msra.mxu0 0.0
    %1501 = vmatprep.subr.mxu0 0.0
    %1502 = vmatpush1.msra.mxu0 0.0
    %1503 = vmatprep.subr.mxu0 0.0
    %1504 = vmatpush1.msra.mxu0 0.0
    %1505 = vmatprep.subr.mxu0 0.0
    %1506 = vmatpush1.msra.mxu0 0.0
    %1507 = vmatprep.subr.mxu0 0.0
    %1508 = vmatpush1.msra.mxu0 0.0
    %1509 = vmatprep.subr.mxu0 0.0
    %1510 = vmatpush1.msra.mxu0 0.0
    %1511 = vmatprep.subr.mxu0 0.0
    %1512 = vmatpush1.msra.mxu0 0.0
    %1513 = vmatprep.subr.mxu0 0.0
    %1514 = vmatpush1.msra.mxu0 0.0
    %1515 = vmatprep.subr.mxu0 0.0
    %1516 = vmatpush1.msra.mxu0 0.0
    %1517 = vmatprep.subr.mxu0 0.0
    %1518 = vmatpush1.msra.mxu0 0.0
    %1519 = vmatprep.subr.mxu0 0.0
    %1520 = vmatpush1.msra.mxu0 0.0
    %1521 = vmatprep.subr.mxu0 0.0
    %1522 = vmatpush1.msra.mxu0 0.0
    %1523 = vmatprep.mubr.f32.mxu0 0.0
    %1524 = vmatmul.mubr.f32.gmra.mrb[0].mxu0 %v1436
    %v1525 = vpop.f32.mrb[0].mxu0
    %v1526 = vadd.f32 0.0, %v1525
    %v1527 = vpop.f32.mrb[0].mxu0
    %1528 = vmatprep.mubr.f32.mxu0 0.0
    %1529 = vmatmul.mubr.f32.gmra.mrb[0].mxu0 %v1439
    %v1530 = vpop.f32.mrb[0].mxu0
    %v1531 = vadd.f32 0.0, %v1530
    %v1532 = vpop.f32.mrb[0].mxu0
    %1533 = vmatprep.mubr.f32.mxu0 0.0
    %1534 = vmatmul.mubr.f32.gmra.mrb[0].mxu0 %v1442
    %v1535 = vpop.f32.mrb[0].mxu0
    %v1536 = vadd.f32 0.0, %v1535
    %v1537 = vpop.f32.mrb[0].mxu0
    %1538 = vmatprep.mubr.f32.mxu0 0.0
    %1539 = vmatmul.mubr.f32.gmra.mrb[0].mxu0 %v1445
    %v1540 = vpop.f32.mrb[0].mxu0
    %v1541 = vadd.f32 0.0, %v1540
    %v1542 = vpop.f32.mrb[0].mxu0
    %1543 = vmatprep.mubr.f32.mxu0 0.0
    %1544 = vmatmul.mubr.f32.gmra.mrb[0].mxu0 %v1448
    %v1545 = vpop.f32.mrb[0].mxu0
    %v1546 = vadd.f32 0.0, %v1545
    %v1547 = vpop.f32.mrb[0].mxu0
    %1548 = vmatprep.mubr.f32.mxu0 0.0
    %1549 = vmatmul.mubr.f32.gmra.mrb[0].mxu0 %v1451
    %v1550 = vpop.f32.mrb[0].mxu0
    %v1551 = vadd.f32 0.0, %v1550
    %v1552 = vpop.f32.mrb[0].mxu0
    %1553 = vmatprep.mubr.f32.mxu0 0.0
    %1554 = vmatmul.mubr.f32.gmra.mrb[0].mxu0 %v1454
    %v1555 = vpop.f32.mrb[0].mxu0
    %v1556 = vadd.f32 0.0, %v1555
    %v1557 = vpop.f32.mrb[0].mxu0
    %1558 = vmatprep.mubr.f32.mxu0 0.0
    %1559 = vmatmul.mubr.f32.gmra.mrb[0].mxu0 %v1457
    %v1560 = vpop.f32.mrb[0].mxu0
    %v1561 = vadd.f32 0.0, %v1560
    %v1562 = vpop.f32.mrb[0].mxu0
    %1563 = vdwg.mxu0
    %1564 = vst [vmem:[#allocation4] sm:$0xff] %v1526
    %1565 = vst [vmem:[#allocation4 + $0x8] sm:$0xff] %v1531
    %1566 = vst [vmem:[#allocation4 + $0x10] sm:$0xff] %v1536
    %1567 = vst [vmem:[#allocation4 + $0x18] sm:$0xff] %v1541
    %1568 = vst [vmem:[#allocation4 + $0x20] sm:$0xff] %v1546
    %1569 = vst [vmem:[#allocation4 + $0x28] sm:$0xff] %v1551
    %1570 = vst [vmem:[#allocation4 + $0x30] sm:$0xff] %v1556
    %1571 = vst [vmem:[#allocation4 + $0x38] sm:$0xff] %v1561
    %v1572 = vld [vmem:[%s1] sm:$0xff]
    %v1573 = vld [vmem:[%s1 + $0x8] sm:$0xff]
    %v1574 = vld [vmem:[%s1 + $0x10] sm:$0xff]
    %v1575 = vld [vmem:[%s1 + $0x18] sm:$0xff]
    %v1576 = vld [vmem:[%s1 + $0x20] sm:$0xff]
    %v1577 = vld [vmem:[%s1 + $0x28] sm:$0xff]
    %v1578 = vld [vmem:[%s1 + $0x30] sm:$0xff]
    %v1579 = vld [vmem:[%s1 + $0x38] sm:$0xff]
    %v1580 = vlaneseq
    %v1581 = vand.u32 %v1580, 127
    %vm1582 = vcmp.lt.s32.totalorder %v1581, 64
    %v1583 = vsel %vm1582, 0.0, -1e+30
    %v1584 = vadd.f32 %v1526, %v1583
    %v1585 = vadd.f32 %v1531, %v1583
    %v1586 = vadd.f32 %v1536, %v1583
    %v1587 = vadd.f32 %v1541, %v1583
    %v1588 = vadd.f32 %v1546, %v1583
    %v1589 = vadd.f32 %v1551, %v1583
    %v1590 = vadd.f32 %v1556, %v1583
    %v1591 = vadd.f32 %v1561, %v1583
    %1592 = vmax.xlane.f32.xlu0 %v1584
    %v1593 = vpop.xlane.xlu0 %1592
    %1594 = vmax.xlane.f32.xlu0 %v1585
    %v1595 = vpop.xlane.xlu0 %1594
    %1596 = vmax.xlane.f32.xlu0 %v1586
    %v1597 = vpop.xlane.xlu0 %1596
    %1598 = vmax.xlane.f32.xlu0 %v1587
    %v1599 = vpop.xlane.xlu0 %1598
    %1600 = vmax.xlane.f32.xlu0 %v1588
    %v1601 = vpop.xlane.xlu0 %1600
    %1602 = vmax.xlane.f32.xlu0 %v1589
    %v1603 = vpop.xlane.xlu0 %1602
    %1604 = vmax.xlane.f32.xlu0 %v1590
    %v1605 = vpop.xlane.xlu0 %1604
    %1606 = vmax.xlane.f32.xlu0 %v1591
    %v1607 = vpop.xlane.xlu0 %1606
    %v1608 = vsub.f32 %v1584, %v1593
    %v1609 = vsub.f32 %v1585, %v1595
    %v1610 = vsub.f32 %v1586, %v1597
    %v1611 = vsub.f32 %v1587, %v1599
    %v1612 = vsub.f32 %v1588, %v1601
    %v1613 = vsub.f32 %v1589, %v1603
    %v1614 = vsub.f32 %v1590, %v1605
    %v1615 = vsub.f32 %v1591, %v1607
    %v1616 = vmul.f32 %v1608, 1.442695
    %v1617 = vpow.pop %v1616
    %v1618 = vmul.f32 %v1609, 1.442695
    %v1619 = vpow.pop %v1618
    %v1620 = vmul.f32 %v1610, 1.442695
    %v1621 = vpow.pop %v1620
    %v1622 = vmul.f32 %v1611, 1.442695
    %v1623 = vpow.pop %v1622
    %v1624 = vmul.f32 %v1612, 1.442695
    %v1625 = vpow.pop %v1624
    %v1626 = vmul.f32 %v1613, 1.442695
    %v1627 = vpow.pop %v1626
    %v1628 = vmul.f32 %v1614, 1.442695
    %v1629 = vpow.pop %v1628
    %v1630 = vmul.f32 %v1615, 1.442695
    %v1631 = vpow.pop %v1630
    %1632 = vadd.xlane.f32.xlu0 %v1617
    %v1633 = vpop.xlane.xlu0 %1632
    %1634 = vadd.xlane.f32.xlu0 %v1619
    %v1635 = vpop.xlane.xlu0 %1634
    %1636 = vadd.xlane.f32.xlu0 %v1621
    %v1637 = vpop.xlane.xlu0 %1636
    %1638 = vadd.xlane.f32.xlu0 %v1623
    %v1639 = vpop.xlane.xlu0 %1638
    %1640 = vadd.xlane.f32.xlu0 %v1625
    %v1641 = vpop.xlane.xlu0 %1640
    %1642 = vadd.xlane.f32.xlu0 %v1627
    %v1643 = vpop.xlane.xlu0 %1642
    %1644 = vadd.xlane.f32.xlu0 %v1629
    %v1645 = vpop.xlane.xlu0 %1644
    %1646 = vadd.xlane.f32.xlu0 %v1631
    %v1647 = vpop.xlane.xlu0 %1646
    %v1648 = vlog2.pop %v1633
    %v1649 = vmul.f32 %v1648, 0.6931472
    %v1650 = vlog2.pop %v1635
    %v1651 = vmul.f32 %v1650, 0.6931472
    %v1652 = vlog2.pop %v1637
    %v1653 = vmul.f32 %v1652, 0.6931472
    %v1654 = vlog2.pop %v1639
    %v1655 = vmul.f32 %v1654, 0.6931472
    %v1656 = vlog2.pop %v1641
    %v1657 = vmul.f32 %v1656, 0.6931472
    %v1658 = vlog2.pop %v1643
    %v1659 = vmul.f32 %v1658, 0.6931472
    %v1660 = vlog2.pop %v1645
    %v1661 = vmul.f32 %v1660, 0.6931472
    %v1662 = vlog2.pop %v1647
    %v1663 = vmul.f32 %v1662, 0.6931472
    %v1664 = vadd.f32 %v1593, %v1649
    %v1665 = vadd.f32 %v1595, %v1651
    %v1666 = vadd.f32 %v1597, %v1653
    %v1667 = vadd.f32 %v1599, %v1655
    %v1668 = vadd.f32 %v1601, %v1657
    %v1669 = vadd.f32 %v1603, %v1659
    %v1670 = vadd.f32 %v1605, %v1661
    %v1671 = vadd.f32 %v1607, %v1663
    %1672 = vset.pattern.permute.xlu0 0
    %1673 = vperm.xlu0 %1672, %v1572
    %v1674 = vpop.permute.xlu0 %1673
    %1675 = vset.pattern.permute.xlu0 0
    %1676 = vperm.xlu0 %1675, %v1573
    %v1677 = vpop.permute.xlu0 %1676
    %1678 = vset.pattern.permute.xlu0 0
    %1679 = vperm.xlu0 %1678, %v1574
    %v1680 = vpop.permute.xlu0 %1679
    %1681 = vset.pattern.permute.xlu0 0
    %1682 = vperm.xlu0 %1681, %v1575
    %v1683 = vpop.permute.xlu0 %1682
    %1684 = vset.pattern.permute.xlu0 0
    %1685 = vperm.xlu0 %1684, %v1576
    %v1686 = vpop.permute.xlu0 %1685
    %1687 = vset.pattern.permute.xlu0 0
    %1688 = vperm.xlu0 %1687, %v1577
    %v1689 = vpop.permute.xlu0 %1688
    %1690 = vset.pattern.permute.xlu0 0
    %1691 = vperm.xlu0 %1690, %v1578
    %v1692 = vpop.permute.xlu0 %1691
    %1693 = vset.pattern.permute.xlu0 0
    %1694 = vperm.xlu0 %1693, %v1579
    %v1695 = vpop.permute.xlu0 %1694
    %vm1696 = vcmp.eq.s32.totalorder %v1581, %v1674
    %vm1697 = vcmp.eq.s32.totalorder %v1581, %v1677
    %vm1698 = vcmp.eq.s32.totalorder %v1581, %v1680
    %vm1699 = vcmp.eq.s32.totalorder %v1581, %v1683
    %vm1700 = vcmp.eq.s32.totalorder %v1581, %v1686
    %vm1701 = vcmp.eq.s32.totalorder %v1581, %v1689
    %vm1702 = vcmp.eq.s32.totalorder %v1581, %v1692
    %vm1703 = vcmp.eq.s32.totalorder %v1581, %v1695
    %v1704 = vsel %vm1696, %v1526, 0.0
    %v1705 = vsel %vm1697, %v1531, 0.0
    %v1706 = vsel %vm1698, %v1536, 0.0
    %v1707 = vsel %vm1699, %v1541, 0.0
    %v1708 = vsel %vm1700, %v1546, 0.0
    %v1709 = vsel %vm1701, %v1551, 0.0
    %v1710 = vsel %vm1702, %v1556, 0.0
    %v1711 = vsel %vm1703, %v1561, 0.0
    %1712 = vadd.xlane.f32.xlu0 %v1704
    %v1713 = vpop.xlane.xlu0 %1712
    %1714 = vadd.xlane.f32.xlu0 %v1705
    %v1715 = vpop.xlane.xlu0 %1714
    %1716 = vadd.xlane.f32.xlu0 %v1706
    %v1717 = vpop.xlane.xlu0 %1716
    %1718 = vadd.xlane.f32.xlu0 %v1707
    %v1719 = vpop.xlane.xlu0 %1718
    %1720 = vadd.xlane.f32.xlu0 %v1708
    %v1721 = vpop.xlane.xlu0 %1720
    %1722 = vadd.xlane.f32.xlu0 %v1709
    %v1723 = vpop.xlane.xlu0 %1722
    %1724 = vadd.xlane.f32.xlu0 %v1710
    %v1725 = vpop.xlane.xlu0 %1724
    %1726 = vadd.xlane.f32.xlu0 %v1711
    %v1727 = vpop.xlane.xlu0 %1726
    %vm1728 = vcmp.eq.s32.totalorder %v1572, 0
    %vm1729 = vcmp.eq.s32.totalorder %v1573, 0
    %vm1730 = vcmp.eq.s32.totalorder %v1574, 0
    %vm1731 = vcmp.eq.s32.totalorder %v1575, 0
    %vm1732 = vcmp.eq.s32.totalorder %v1576, 0
    %vm1733 = vcmp.eq.s32.totalorder %v1577, 0
    %vm1734 = vcmp.eq.s32.totalorder %v1578, 0
    %vm1735 = vcmp.eq.s32.totalorder %v1579, 0
    %v1736 = vsub.f32 %v1664, %v1713
    %v1737 = vsub.f32 %v1665, %v1715
    %v1738 = vsub.f32 %v1666, %v1717
    %v1739 = vsub.f32 %v1667, %v1719
    %v1740 = vsub.f32 %v1668, %v1721
    %v1741 = vsub.f32 %v1669, %v1723
    %v1742 = vsub.f32 %v1670, %v1725
    %v1743 = vsub.f32 %v1671, %v1727
    %v1744 = vsel %vm1728, 0.0, %v1736
    %v1745 = vsel %vm1729, 0.0, %v1737
    %v1746 = vsel %vm1730, 0.0, %v1738
    %v1747 = vsel %vm1731, 0.0, %v1739
    %v1748 = vsel %vm1732, 0.0, %v1740
    %v1749 = vsel %vm1733, 0.0, %v1741
    %v1750 = vsel %vm1734, 0.0, %v1742
    %v1751 = vsel %vm1735, 0.0, %v1743
    %1752 = vst.msk [vmem:[%s10] sm:$0xff] %vm280, %v1744
    %1753 = vst.msk [vmem:[%s10 + $0x8] sm:$0xff] %vm280, %v1745
    %1754 = vst.msk [vmem:[%s10 + $0x10] sm:$0xff] %vm280, %v1746
    %1755 = vst.msk [vmem:[%s10 + $0x18] sm:$0xff] %vm280, %v1747
    %1756 = vst.msk [vmem:[%s10 + $0x20] sm:$0xff] %vm280, %v1748
    %1757 = vst.msk [vmem:[%s10 + $0x28] sm:$0xff] %vm280, %v1749
    %1758 = vst.msk [vmem:[%s10 + $0x30] sm:$0xff] %vm280, %v1750
    %1759 = vst.msk [vmem:[%s10 + $0x38] sm:$0xff] %vm280, %v1751
    // Predicated region
    $region38: #{tpu_custom_call.1} parent=1 // pred_check
      _
    $region39: #{tpu_custom_call.1} parent=1 // pred_check_branch
      %1761 = sbr.rel (0) target = $region41
    $region40: #{tpu_custom_call.1} parent=1 // pred_region
      %s1763 = ssub.s32 1024, 1024
      %1764 = vsyncadd [#allocation5], %s1763
      %s1765 = sshll.u32 [#allocation4], 4
      %s1766 = int_to_ptr.vmem [resolvable:$true] %s1765
      %1771 = dma.vmem_to_hbm [thread:$0]  %s1766, 1024, %s9, [#allocation5], 128, 128, 8
    $region41: #{tpu_custom_call.1} parent=1 // pred_fallthru
      _
    // Predicated region
    $region42: #{tpu_custom_call.1} parent=1 // pred_check
      _
    $region43: #{tpu_custom_call.1} parent=1 // pred_check_branch
      %1773 = sbr.rel (0) target = $region45
    $region44: #{tpu_custom_call.1} parent=1 // pred_region
      _
    $region45: #{tpu_custom_call.1} parent=1 // pred_fallthru
      _
    // Predicated region
    $region46: #{tpu_custom_call.1} parent=1 // pred_check
      _
    $region47: #{tpu_custom_call.1} parent=1 // pred_check_branch
      %1775 = sbr.rel (0) target = $region49
    $region48: #{tpu_custom_call.1} parent=1 // pred_region
      %1776 = dma.done [#allocation5], 1024
    $region49: #{tpu_custom_call.1} parent=1 // pred_fallthru
      _
    // Predicated region
    $region50: #{tpu_custom_call.1} parent=1 // pred_check
      _
    $region51: #{tpu_custom_call.1} parent=1 // pred_check_branch
      %1778 = sbr.rel (0) target = $region53
    $region52: #{tpu_custom_call.1} parent=1 // pred_region
      _
    $region53: #{tpu_custom_call.1} parent=1 // pred_fallthru
      _
    %1779 = vsyncpa [#allocation5], 1

</llo_original>
